<compile_context>
chip_gen: v7x
topology: tpu7x:2x2x1
jax: 0.10.0
libtpu: 0.0.40
codegen_flags: <defaults>
</compile_context>

<pallas_src>
import functools
import math

import jax
import jax.numpy as jnp
from jax import lax
from jax.experimental import pallas as pl
from jax.experimental.pallas import tpu as pltpu


def _sigmoid(x):
    return 1.0 / (1.0 + jnp.exp(-x))


def _softplus(x):
    return jnp.maximum(x, 0.0) + jnp.log(1.0 + jnp.exp(-jnp.abs(x)))


# ---------------------------------------------------------------------------
# Kernel 1: fused Block  (Add -> LayerNorm -> Mamba mixer), per batch element
# ---------------------------------------------------------------------------
def _block_kernel(h_ref, r_ref, nw_ref, nb_ref,
                  win_ref, wconv_ref, bconv_ref, wxp_ref, wdt_ref, bdt_ref,
                  anegT_ref, dparam_ref, wout_ref,
                  hid_ref, res_ref,
                  dA_s, dBx_s, cm_s, y_s,
                  *, L, d_inner, d_state, d_conv, dt_rank, eps):
    # ---- Add + LayerNorm (prenorm), residual emitted as second output ------
    h = h_ref[0].astype(jnp.float32)                                   # (L, D)
    r = r_ref[0].astype(jnp.float32)                                   # (L, D)
    resid = h + r
    res_ref[0] = resid
    mean = jnp.mean(resid, axis=-1, keepdims=True)
    cent = resid - mean
    var = jnp.mean(cent * cent, axis=-1, keepdims=True)
    x = cent * lax.rsqrt(var + eps) * nw_ref[...] + nb_ref[...]        # (L, D) f32

    # ---- in_proj (bf16 MXU): x @ W_in -> [x_part | z] ----------------------
    xz = jnp.dot(x.astype(jnp.bfloat16), win_ref[...],
                 preferred_element_type=jnp.float32)                   # (L, 2*d_inner)
    xp = xz[:, :d_inner]
    z = xz[:, d_inner:]

    # ---- causal depthwise conv1d (kernel d_conv, left pad d_conv-1) + SiLU -
    row = lax.broadcasted_iota(jnp.int32, (L, 1), 0)                   # (L, 1)
    conv = xp * wconv_ref[d_conv - 1:d_conv, :] + bconv_ref[...]
    for k in range(d_conv - 1):
        shift = d_conv - 1 - k
        xs = jnp.where(row < shift, 0.0, pltpu.roll(xp, shift=shift, axis=0))
        conv = conv + xs * wconv_ref[k:k + 1, :]
    xc = conv * _sigmoid(conv)                                         # SiLU, (L, d_inner)

    # ---- x_proj / dt_proj (bf16 MXU) ---------------------------------------
    x_dbl = jnp.dot(xc.astype(jnp.bfloat16), wxp_ref[...],
                    preferred_element_type=jnp.float32)                # (L, dt_rank+2*d_state)
    dt_low = x_dbl[:, :dt_rank]
    Bm = x_dbl[:, dt_rank:dt_rank + d_state]                           # (L, d_state)
    Cm = x_dbl[:, dt_rank + d_state:dt_rank + 2 * d_state]             # (L, d_state)
    dt = jnp.dot(dt_low.astype(jnp.bfloat16), wdt_ref[...],
                 preferred_element_type=jnp.float32) + bdt_ref[...]
    dt = _softplus(dt)                                                 # (L, d_inner) f32

    # ---- selective scan: lane-dense (d_state, d_inner) state layout --------
    # h_l = exp(dt_l * A) * h_{l-1} + (dt_l * x_l) * B_l ;  y_l = C_l . h_l
    A_neg = anegT_ref[...]                                             # (d_state, d_inner) = -exp(A_log)^T
    dA_s[...] = jnp.exp(dt[:, None, :] * A_neg[None, :, :])            # (L, d_state, d_inner)
    dBx_s[...] = (dt * xc)[:, None, :] * Bm[:, :, None]                # (L, d_state, d_inner)
    cm_s[...] = Cm                                                     # (L, d_state)

    def _step(l, hstate):
        hstate = hstate * dA_s[l] + dBx_s[l]                           # (d_state, d_inner)
        c_row = cm_s[pl.ds(l, 1), :]                                   # (1, d_state)
        y_s[pl.ds(l, 1), :] = jnp.dot(c_row, hstate,
                                      preferred_element_type=jnp.float32)
        return hstate

    # h lives in vregs across the serial recurrence (no VMEM round trip per step).
    lax.fori_loop(0, L, _step, jnp.zeros((d_state, d_inner), jnp.float32))

    # TODO(synk): chunked/block-parallel SSM formulation (MXU contractions per L-chunk)
    # is the remaining big upside on v6e/v7x; the recurrence here is still per-step VPU.
    y = y_s[...] + dparam_ref[...] * xc                                # (L, d_inner)
    y = y * (z * _sigmoid(z))                                          # gate: y * SiLU(z)

    # ---- out_proj (bf16 MXU) ------------------------------------------------
    hid_ref[0] = jnp.dot(y.astype(jnp.bfloat16), wout_ref[...],
                         preferred_element_type=jnp.float32)


def _w_spec(arr):
    nd = arr.ndim
    return pl.BlockSpec(arr.shape, lambda b, _nd=nd: (0,) * _nd)


def mamba_block(hidden, residual, kp, *, d_inner, d_state, d_conv, dt_rank, eps=1e-5):
    B, L, D = hidden.shape
    kernel = functools.partial(_block_kernel, L=L, d_inner=d_inner, d_state=d_state,
                               d_conv=d_conv, dt_rank=dt_rank, eps=eps)
    weights = (kp["norm_w"], kp["norm_b"], kp["win"], kp["wconv"], kp["bconv"],
               kp["wxp"], kp["wdt"], kp["bdt"], kp["anegT"], kp["dparam"], kp["wout"])
    act_spec = pl.BlockSpec((1, L, D), lambda b: (b, 0, 0))
    # TODO(synk): for long sequences add an L-tile grid axis (conv/scan state carried
    # across chunks) so VMEM stays bounded independent of L.
    return pl.pallas_call(
        kernel,
        out_shape=(jax.ShapeDtypeStruct((B, L, D), jnp.float32),
                   jax.ShapeDtypeStruct((B, L, D), jnp.float32)),
        grid=(B,),
        in_specs=[act_spec, act_spec] + [_w_spec(w) for w in weights],
        out_specs=(act_spec, act_spec),
        scratch_shapes=[
            pltpu.VMEM((L, d_state, d_inner), jnp.float32),   # exp(dt*A), lane-dense
            pltpu.VMEM((L, d_state, d_inner), jnp.float32),   # dt*B*x,    lane-dense
            pltpu.VMEM((L, d_state), jnp.float32),            # C rows
            pltpu.VMEM((L, d_inner), jnp.float32),            # per-step y
        ],
        compiler_params=pltpu.CompilerParams(
            dimension_semantics=("parallel",),
            vmem_limit_bytes=32 * 1024 * 1024),
    )(hidden, residual, *weights)


# ---------------------------------------------------------------------------
# Kernel 2: standalone Add + LayerNorm (norm_f feature taps only)
# ---------------------------------------------------------------------------
def _tap_norm_kernel(h_ref, r_ref, w_ref, b_ref, out_ref, *, eps):
    resid = h_ref[0].astype(jnp.float32) + r_ref[0].astype(jnp.float32)
    mean = jnp.mean(resid, axis=-1, keepdims=True)
    cent = resid - mean
    var = jnp.mean(cent * cent, axis=-1, keepdims=True)
    out_ref[0] = cent * lax.rsqrt(var + eps) * w_ref[...] + b_ref[...]


def tap_norm(hidden, residual, w, b, eps=1e-5):
    B, L, D = hidden.shape
    kernel = functools.partial(_tap_norm_kernel, eps=eps)
    act_spec = pl.BlockSpec((1, L, D), lambda b: (b, 0, 0))
    return pl.pallas_call(
        kernel,
        out_shape=jax.ShapeDtypeStruct((B, L, D), jnp.float32),
        grid=(B,),
        in_specs=[act_spec, act_spec,
                  pl.BlockSpec((1, D), lambda b: (0, 0)),
                  pl.BlockSpec((1, D), lambda b: (0, 0))],
        out_specs=act_spec,
        compiler_params=pltpu.CompilerParams(dimension_semantics=("parallel",)),
    )(hidden, residual, w, b)


# ---------------------------------------------------------------------------
# Model glue (parameter init + forward orchestration)
# ---------------------------------------------------------------------------
def _q_bf16(w):
    # Round matmul weights to bf16-representable values so the bf16 kernel and the
    # f32 reference share identical weights (only accumulation precision differs).
    return w.astype(jnp.bfloat16).astype(jnp.float32)


def init_params(key, d_model, n_layer, d_state, d_conv, expand):
    d_inner = expand * d_model
    dt_rank = math.ceil(d_model / 16)
    params = []
    for i in range(n_layer):
        ks = jax.random.split(jax.random.fold_in(key, i), 6)
        params.append(dict(
            norm_w=jnp.ones((1, d_model), jnp.float32),
            norm_b=jnp.zeros((1, d_model), jnp.float32),
            win=_q_bf16(0.05 * jax.random.normal(ks[0], (d_model, 2 * d_inner), jnp.float32)),
            wconv=0.2 * jax.random.normal(ks[1], (d_conv, d_inner), jnp.float32),
            bconv=jnp.zeros((1, d_inner), jnp.float32),
            wxp=_q_bf16(0.05 * jax.random.normal(ks[2], (d_inner, dt_rank + 2 * d_state),
                                                 jnp.float32)),
            wdt=_q_bf16(0.2 * jax.random.normal(ks[3], (dt_rank, d_inner), jnp.float32)),
            bdt=jnp.full((1, d_inner), -1.0, jnp.float32)
                + 0.1 * jax.random.normal(ks[4], (1, d_inner), jnp.float32),
            alog=jnp.log(jnp.tile(jnp.arange(1, d_state + 1, dtype=jnp.float32)[None, :],
                                  (d_inner, 1))),
            dparam=jnp.ones((1, d_inner), jnp.float32),
            wout=_q_bf16(0.05 * jax.random.normal(ks[5], (d_inner, d_model), jnp.float32)),
        ))
    norm_f = (jnp.ones((1, d_model), jnp.float32), jnp.zeros((1, d_model), jnp.float32))
    return params, norm_f


def prepare_layer(p):
    """Kernel-ready parameter forms: bf16 matmul weights, transposed -exp(A_log)."""
    return dict(
        norm_w=p["norm_w"], norm_b=p["norm_b"],
        win=p["win"].astype(jnp.bfloat16),
        wconv=p["wconv"], bconv=p["bconv"],
        wxp=p["wxp"].astype(jnp.bfloat16),
        wdt=p["wdt"].astype(jnp.bfloat16),
        bdt=p["bdt"],
        anegT=(-jnp.exp(p["alog"])).T,             # (d_state, d_inner), f32
        dparam=p["dparam"],
        wout=p["wout"].astype(jnp.bfloat16),
    )


def pallas_forward(x, pos, params, norm_f, fetch_idx, cfg):
    # MixerModelForSegmentation.forward: hidden = input + pos; per Block:
    #   residual = hidden + residual ; hidden = Mamba(LN(residual))
    # and at fetch_idx: feature = norm_f(hidden + residual)
    # TODO(synk): DropPath / Dropout are identity at inference and are not modeled.
    hidden = (x + pos).astype(jnp.float32)          # glue (positional add)
    residual = jnp.zeros_like(hidden)               # first block: residual == hidden
    kparams = [prepare_layer(p) for p in params]
    feats = []
    for idx, kp in enumerate(kparams):
        hidden, residual = mamba_block(hidden, residual, kp, **cfg)
        if idx in fetch_idx:
            feats.append(tap_norm(hidden, residual, norm_f[0], norm_f[1]))
    return feats


# ---------------------------------------------------------------------------
# Pure-JAX reference (same semantics, f32 HIGHEST-precision matmuls)
# ---------------------------------------------------------------------------
_HI = lax.Precision.HIGHEST


def _ref_layernorm(x, w, b, eps=1e-5):
    mean = jnp.mean(x, axis=-1, keepdims=True)
    var = jnp.mean((x - mean) ** 2, axis=-1, keepdims=True)
    return (x - mean) / jnp.sqrt(var + eps) * w[0] + b[0]


def _ref_mamba(x, p, d_inner, d_state, d_conv, dt_rank):
    Bsz, L, D = x.shape
    xz = jnp.einsum("bld,de->ble", x, p["win"], precision=_HI)
    xp, z = xz[..., :d_inner], xz[..., d_inner:]
    xp_pad = jnp.pad(xp, ((0, 0), (d_conv - 1, 0), (0, 0)))
    conv = sum(xp_pad[:, k:k + L, :] * p["wconv"][k][None, None, :] for k in range(d_conv))
    conv = conv + p["bconv"][None]
    xc = conv * jax.nn.sigmoid(conv)
    x_dbl = jnp.einsum("ble,ef->blf", xc, p["wxp"], precision=_HI)
    dt = jax.nn.softplus(jnp.einsum("blr,re->ble", x_dbl[..., :dt_rank], p["wdt"],
                                    precision=_HI) + p["bdt"][None])
    Bm = x_dbl[..., dt_rank:dt_rank + d_state]
    Cm = x_dbl[..., dt_rank + d_state:]
    A = -jnp.exp(p["alog"])

    def step(h, inp):
        dt_t, b_t, c_t, x_t = inp
        h = h * jnp.exp(dt_t[..., None] * A) + (dt_t * x_t)[..., None] * b_t[:, None, :]
        y = jnp.einsum("bds,bs->bd", h, c_t, precision=_HI)
        return h, y

    h0 = jnp.zeros((Bsz, d_inner, d_state), jnp.float32)
    xs = (jnp.swapaxes(dt, 0, 1), jnp.swapaxes(Bm, 0, 1),
          jnp.swapaxes(Cm, 0, 1), jnp.swapaxes(xc, 0, 1))
    _, ys = lax.scan(step, h0, xs)
    y = jnp.swapaxes(ys, 0, 1) + p["dparam"][None] * xc
    y = y * (z * jax.nn.sigmoid(z))
    return jnp.einsum("ble,ed->bld", y, p["wout"], precision=_HI)


def ref_forward(x, pos, params, norm_f, fetch_idx, cfg):
    hidden = x + pos
    residual = None
    feats = []
    for idx, p in enumerate(params):
        residual = hidden if residual is None else hidden + residual
        normed = _ref_layernorm(residual, p["norm_w"], p["norm_b"])
        hidden = _ref_mamba(normed, p, **cfg)
        if idx in fetch_idx:
            feats.append(_ref_layernorm(hidden + residual, norm_f[0], norm_f[1]))
    return feats


if __name__ == "__main__":
    # Small but shape-consistent config (original default: n_layer=12, fetch_idx=[3,7,11];
    # scaled down here to n_layer=4, fetch_idx=(1,3)).
    B, L, d_model = 2, 8, 32
    n_layer, fetch_idx = 4, (1, 3)
    d_state, d_conv, expand = 16, 4, 2
    d_inner = expand * d_model
    dt_rank = math.ceil(d_model / 16)
    cfg = dict(d_inner=d_inner, d_state=d_state, d_conv=d_conv, dt_rank=dt_rank)

    key = jax.random.PRNGKey(0)
    kx, kp, kw = jax.random.split(key, 3)
    x = jax.random.normal(kx, (B, L, d_model), jnp.float32)          # input_ids (tokens)
    pos = 0.1 * jax.random.normal(kp, (B, L, d_model), jnp.float32)  # pos embedding
    params, norm_f = init_params(kw, d_model, n_layer, d_state, d_conv, expand)

    feats = pallas_forward(x, pos, params, norm_f, fetch_idx, cfg)
    feats = [jax.block_until_ready(f) for f in feats]

    refs = ref_forward(x, pos, params, norm_f, fetch_idx, cfg)
    assert len(feats) == len(fetch_idx)
    for f, r in zip(feats, refs):
        assert f.shape == (B, L, d_model)
        if not jnp.allclose(f, r, rtol=5e-2, atol=5e-2):
            raise SystemExit("mismatch vs pure-JAX reference")

    print("KERNEL_OK")
</pallas_src>

<mosaic_0001>
module attributes {stable_mosaic.version = 11 : i64} {
  func.func @_block_kernel(%arg0: i32, %arg1: memref<1x8x32xf32, #tpu.memory_space<vmem>>, %arg2: memref<1x8x32xf32, #tpu.memory_space<vmem>>, %arg3: memref<1x32xf32, #tpu.memory_space<vmem>>, %arg4: memref<1x32xf32, #tpu.memory_space<vmem>>, %arg5: memref<32x128xbf16, #tpu.memory_space<vmem>>, %arg6: memref<4x64xf32, #tpu.memory_space<vmem>>, %arg7: memref<1x64xf32, #tpu.memory_space<vmem>>, %arg8: memref<64x34xbf16, #tpu.memory_space<vmem>>, %arg9: memref<2x64xbf16, #tpu.memory_space<vmem>>, %arg10: memref<1x64xf32, #tpu.memory_space<vmem>>, %arg11: memref<16x64xf32, #tpu.memory_space<vmem>>, %arg12: memref<1x64xf32, #tpu.memory_space<vmem>>, %arg13: memref<64x32xbf16, #tpu.memory_space<vmem>>, %arg14: memref<1x8x32xf32, #tpu.memory_space<vmem>>, %arg15: memref<1x8x32xf32, #tpu.memory_space<vmem>>, %arg16: memref<8x16x64xf32, #tpu.memory_space<vmem>>, %arg17: memref<8x16x64xf32, #tpu.memory_space<vmem>>, %arg18: memref<8x16xf32, #tpu.memory_space<vmem>>, %arg19: memref<8x64xf32, #tpu.memory_space<vmem>>) attributes {dimension_semantics = [#tpu.dimension_semantics<parallel>], iteration_bounds = array<i64: 2>, scalar_prefetch = 0 : i64, scratch_operands = 4 : i64, tpu.core_type = #tpu.core_type<tc>, window_params = [{transform_indices = @transform_0, window_bounds = array<i64: 1, 8, 32>}, {transform_indices = @transform_1, window_bounds = array<i64: 1, 8, 32>}, {pipeline_mode = #tpu.pipeline_mode<synchronous>, transform_indices = @transform_2, window_bounds = array<i64: 1, 32>}, {pipeline_mode = #tpu.pipeline_mode<synchronous>, transform_indices = @transform_3, window_bounds = array<i64: 1, 32>}, {pipeline_mode = #tpu.pipeline_mode<synchronous>, transform_indices = @transform_4, window_bounds = array<i64: 32, 128>}, {pipeline_mode = #tpu.pipeline_mode<synchronous>, transform_indices = @transform_5, window_bounds = array<i64: 4, 64>}, {pipeline_mode = #tpu.pipeline_mode<synchronous>, transform_indices = @transform_6, window_bounds = array<i64: 1, 64>}, {pipeline_mode = #tpu.pipeline_mode<synchronous>, transform_indices = @transform_7, window_bounds = array<i64: 64, 34>}, {pipeline_mode = #tpu.pipeline_mode<synchronous>, transform_indices = @transform_8, window_bounds = array<i64: 2, 64>}, {pipeline_mode = #tpu.pipeline_mode<synchronous>, transform_indices = @transform_9, window_bounds = array<i64: 1, 64>}, {pipeline_mode = #tpu.pipeline_mode<synchronous>, transform_indices = @transform_10, window_bounds = array<i64: 16, 64>}, {pipeline_mode = #tpu.pipeline_mode<synchronous>, transform_indices = @transform_11, window_bounds = array<i64: 1, 64>}, {pipeline_mode = #tpu.pipeline_mode<synchronous>, transform_indices = @transform_12, window_bounds = array<i64: 64, 32>}, {transform_indices = @transform_13, window_bounds = array<i64: 1, 8, 32>}, {transform_indices = @transform_14, window_bounds = array<i64: 1, 8, 32>}]} {
    %c0 = arith.constant 0 : index
    %c0_0 = arith.constant 0 : index
    %c0_1 = arith.constant 0 : index
    %0 = vector.load %arg1[%c0, %c0_0, %c0_1] : memref<1x8x32xf32, #tpu.memory_space<vmem>>, vector<1x8x32xf32>
    %1 = vector.shape_cast %0 : vector<1x8x32xf32> to vector<8x32xf32>
    %c0_2 = arith.constant 0 : index
    %c0_3 = arith.constant 0 : index
    %c0_4 = arith.constant 0 : index
    %2 = vector.load %arg2[%c0_2, %c0_3, %c0_4] : memref<1x8x32xf32, #tpu.memory_space<vmem>>, vector<1x8x32xf32>
    %3 = vector.shape_cast %2 : vector<1x8x32xf32> to vector<8x32xf32>
    %4 = arith.addf %1, %3 : vector<8x32xf32>
    %c0_5 = arith.constant 0 : index
    %c0_6 = arith.constant 0 : index
    %c0_7 = arith.constant 0 : index
    %5 = vector.load %arg15[%c0_5, %c0_6, %c0_7] : memref<1x8x32xf32, #tpu.memory_space<vmem>>, vector<1x8x32xf32>
    %6 = vector.shape_cast %5 : vector<1x8x32xf32> to vector<8x32xf32>
    %7 = vector.shape_cast %4 : vector<8x32xf32> to vector<1x8x32xf32>
    tpu.vector_store %arg15[%c0_5, %c0_6, %c0_7], %7 {strides = array<i32>} : memref<1x8x32xf32, #tpu.memory_space<vmem>>, vector<1x8x32xf32>,
    %cst = arith.constant dense<0.000000e+00> : vector<8xf32>
    %8 = vector.multi_reduction <add>, %4, %cst [1] : vector<8x32xf32> to vector<8xf32>
    %9 = vector.shape_cast %8 : vector<8xf32> to vector<8x1xf32>
    %cst_8 = arith.constant 3.200000e+01 : f32
    %10 = vector.broadcast %cst_8 : f32 to vector<8x1xf32>
    %11 = arith.divf %9, %10 : vector<8x1xf32>
    %12 = vector.broadcast %11 : vector<8x1xf32> to vector<8x32xf32>
    %13 = arith.subf %4, %12 : vector<8x32xf32>
    %14 = arith.mulf %13, %13 : vector<8x32xf32>
    %cst_9 = arith.constant dense<0.000000e+00> : vector<8xf32>
    %15 = vector.multi_reduction <add>, %14, %cst_9 [1] : vector<8x32xf32> to vector<8xf32>
    %16 = vector.shape_cast %15 : vector<8xf32> to vector<8x1xf32>
    %cst_10 = arith.constant 3.200000e+01 : f32
    %17 = vector.broadcast %cst_10 : f32 to vector<8x1xf32>
    %18 = arith.divf %16, %17 : vector<8x1xf32>
    %cst_11 = arith.constant 9.99999974E-6 : f32
    %19 = vector.broadcast %cst_11 : f32 to vector<8x1xf32>
    %20 = arith.addf %18, %19 : vector<8x1xf32>
    %21 = math.rsqrt %20 : vector<8x1xf32>
    %22 = vector.broadcast %21 : vector<8x1xf32> to vector<8x32xf32>
    %23 = arith.mulf %13, %22 : vector<8x32xf32>
    %c0_12 = arith.constant 0 : index
    %c0_13 = arith.constant 0 : index
    %24 = vector.load %arg3[%c0_12, %c0_13] : memref<1x32xf32, #tpu.memory_space<vmem>>, vector<1x32xf32>
    %25 = vector.broadcast %24 : vector<1x32xf32> to vector<8x32xf32>
    %26 = arith.mulf %23, %25 : vector<8x32xf32>
    %c0_14 = arith.constant 0 : index
    %c0_15 = arith.constant 0 : index
    %27 = vector.load %arg4[%c0_14, %c0_15] : memref<1x32xf32, #tpu.memory_space<vmem>>, vector<1x32xf32>
    %28 = vector.broadcast %27 : vector<1x32xf32> to vector<8x32xf32>
    %29 = arith.addf %26, %28 : vector<8x32xf32>
    %30 = arith.truncf %29 : vector<8x32xf32> to vector<8x32xbf16>
    %c0_16 = arith.constant 0 : index
    %c0_17 = arith.constant 0 : index
    %31 = vector.load %arg5[%c0_16, %c0_17] : memref<32x128xbf16, #tpu.memory_space<vmem>>, vector<32x128xbf16>
    %cst_18 = arith.constant dense<0.000000e+00> : vector<8x128xf32>
    %32 = tpu.matmul %30, %31, %cst_18 {dimension_numbers = #tpu.dot_dimension_numbers<[1], [0], [0], [1], [0, 0, 1, 1], [], []>} : vector<8x32xbf16>, vector<32x128xbf16>, vector<8x128xf32> -> vector<8x128xf32>
    %33 = vector.extract_strided_slice %32 {offsets = [0, 0], sizes = [8, 64], strides = [1, 1]} : vector<8x128xf32> to vector<8x64xf32>
    %34 = vector.extract_strided_slice %32 {offsets = [0, 64], sizes = [8, 64], strides = [1, 1]} : vector<8x128xf32> to vector<8x64xf32>
    %35 = tpu.iota {dimensions = array<i32: 0>} : vector<8x1xi32>
    %c3 = arith.constant 3 : index
    %c0_19 = arith.constant 0 : index
    %36 = vector.load %arg6[%c3, %c0_19] : memref<4x64xf32, #tpu.memory_space<vmem>>, vector<1x64xf32>
    %37 = vector.broadcast %36 : vector<1x64xf32> to vector<8x64xf32>
    %38 = arith.mulf %33, %37 : vector<8x64xf32>
    %c0_20 = arith.constant 0 : index
    %c0_21 = arith.constant 0 : index
    %39 = vector.load %arg7[%c0_20, %c0_21] : memref<1x64xf32, #tpu.memory_space<vmem>>, vector<1x64xf32>
    %40 = vector.broadcast %39 : vector<1x64xf32> to vector<8x64xf32>
    %41 = arith.addf %38, %40 : vector<8x64xf32>
    %c3_i32 = arith.constant 3 : i32
    %42 = vector.broadcast %c3_i32 : i32 to vector<8x1xi32>
    %43 = arith.cmpi slt, %35, %42 : vector<8x1xi32>
    %c3_i32_22 = arith.constant 3 : i32
    %44 = tpu.dynamic_rotate %33 by %c3_i32_22 dim 0 : vector<8x64xf32>, i32 -> vector<8x64xf32>
    %cst_23 = arith.constant 0.000000e+00 : f32
    %45 = vector.shape_cast %43 : vector<8x1xi1> to vector<8x1xi1>
    %46 = vector.broadcast %45 : vector<8x1xi1> to vector<8x64xi1>
    %47 = vector.broadcast %cst_23 : f32 to vector<8x64xf32>
    %48 = arith.select %46, %47, %44 : vector<8x64xi1>, vector<8x64xf32>
    %c0_24 = arith.constant 0 : index
    %c0_25 = arith.constant 0 : index
    %49 = vector.load %arg6[%c0_24, %c0_25] : memref<4x64xf32, #tpu.memory_space<vmem>>, vector<1x64xf32>
    %50 = vector.broadcast %49 : vector<1x64xf32> to vector<8x64xf32>
    %51 = arith.mulf %48, %50 : vector<8x64xf32>
    %52 = arith.addf %41, %51 : vector<8x64xf32>
    %c2_i32 = arith.constant 2 : i32
    %53 = vector.broadcast %c2_i32 : i32 to vector<8x1xi32>
    %54 = arith.cmpi slt, %35, %53 : vector<8x1xi32>
    %c2_i32_26 = arith.constant 2 : i32
    %55 = tpu.dynamic_rotate %33 by %c2_i32_26 dim 0 : vector<8x64xf32>, i32 -> vector<8x64xf32>
    %cst_27 = arith.constant 0.000000e+00 : f32
    %56 = vector.shape_cast %54 : vector<8x1xi1> to vector<8x1xi1>
    %57 = vector.broadcast %56 : vector<8x1xi1> to vector<8x64xi1>
    %58 = vector.broadcast %cst_27 : f32 to vector<8x64xf32>
    %59 = arith.select %57, %58, %55 : vector<8x64xi1>, vector<8x64xf32>
    %c1 = arith.constant 1 : index
    %c0_28 = arith.constant 0 : index
    %60 = vector.load %arg6[%c1, %c0_28] : memref<4x64xf32, #tpu.memory_space<vmem>>, vector<1x64xf32>
    %61 = vector.broadcast %60 : vector<1x64xf32> to vector<8x64xf32>
    %62 = arith.mulf %59, %61 : vector<8x64xf32>
    %63 = arith.addf %52, %62 : vector<8x64xf32>
    %c1_i32 = arith.constant 1 : i32
    %64 = vector.broadcast %c1_i32 : i32 to vector<8x1xi32>
    %65 = arith.cmpi slt, %35, %64 : vector<8x1xi32>
    %c1_i32_29 = arith.constant 1 : i32
    %66 = tpu.dynamic_rotate %33 by %c1_i32_29 dim 0 : vector<8x64xf32>, i32 -> vector<8x64xf32>
    %cst_30 = arith.constant 0.000000e+00 : f32
    %67 = vector.shape_cast %65 : vector<8x1xi1> to vector<8x1xi1>
    %68 = vector.broadcast %67 : vector<8x1xi1> to vector<8x64xi1>
    %69 = vector.broadcast %cst_30 : f32 to vector<8x64xf32>
    %70 = arith.select %68, %69, %66 : vector<8x64xi1>, vector<8x64xf32>
    %c2 = arith.constant 2 : index
    %c0_31 = arith.constant 0 : index
    %71 = vector.load %arg6[%c2, %c0_31] : memref<4x64xf32, #tpu.memory_space<vmem>>, vector<1x64xf32>
    %72 = vector.broadcast %71 : vector<1x64xf32> to vector<8x64xf32>
    %73 = arith.mulf %70, %72 : vector<8x64xf32>
    %74 = arith.addf %63, %73 : vector<8x64xf32>
    %cst_32 = arith.constant 0.000000e+00 : f32
    %75 = vector.broadcast %cst_32 : f32 to vector<8x64xf32>
    %76 = arith.subf %75, %74 : vector<8x64xf32>
    %77 = math.exp %76 : vector<8x64xf32>
    %cst_33 = arith.constant 1.000000e+00 : f32
    %78 = vector.broadcast %cst_33 : f32 to vector<8x64xf32>
    %79 = arith.addf %78, %77 : vector<8x64xf32>
    %cst_34 = arith.constant 1.000000e+00 : f32
    %80 = vector.broadcast %cst_34 : f32 to vector<8x64xf32>
    %81 = arith.divf %80, %79 : vector<8x64xf32>
    %82 = arith.mulf %74, %81 : vector<8x64xf32>
    %83 = arith.truncf %82 : vector<8x64xf32> to vector<8x64xbf16>
    %c0_35 = arith.constant 0 : index
    %c0_36 = arith.constant 0 : index
    %84 = vector.load %arg8[%c0_35, %c0_36] : memref<64x34xbf16, #tpu.memory_space<vmem>>, vector<64x34xbf16>
    %cst_37 = arith.constant dense<0.000000e+00> : vector<8x34xf32>
    %85 = tpu.matmul %83, %84, %cst_37 {dimension_numbers = #tpu.dot_dimension_numbers<[1], [0], [0], [1], [0, 0, 1, 1], [], []>} : vector<8x64xbf16>, vector<64x34xbf16>, vector<8x34xf32> -> vector<8x34xf32>
    %86 = vector.extract_strided_slice %85 {offsets = [0, 0], sizes = [8, 2], strides = [1, 1]} : vector<8x34xf32> to vector<8x2xf32>
    %87 = vector.extract_strided_slice %85 {offsets = [0, 2], sizes = [8, 16], strides = [1, 1]} : vector<8x34xf32> to vector<8x16xf32>
    %88 = vector.extract_strided_slice %85 {offsets = [0, 18], sizes = [8, 16], strides = [1, 1]} : vector<8x34xf32> to vector<8x16xf32>
    %89 = arith.truncf %86 : vector<8x2xf32> to vector<8x2xbf16>
    %c0_38 = arith.constant 0 : index
    %c0_39 = arith.constant 0 : index
    %90 = vector.load %arg9[%c0_38, %c0_39] : memref<2x64xbf16, #tpu.memory_space<vmem>>, vector<2x64xbf16>
    %cst_40 = arith.constant dense<0.000000e+00> : vector<8x64xf32>
    %91 = tpu.matmul %89, %90, %cst_40 {dimension_numbers = #tpu.dot_dimension_numbers<[1], [0], [0], [1], [0, 0, 1, 1], [], []>} : vector<8x2xbf16>, vector<2x64xbf16>, vector<8x64xf32> -> vector<8x64xf32>
    %c0_41 = arith.constant 0 : index
    %c0_42 = arith.constant 0 : index
    %92 = vector.load %arg10[%c0_41, %c0_42] : memref<1x64xf32, #tpu.memory_space<vmem>>, vector<1x64xf32>
    %93 = vector.broadcast %92 : vector<1x64xf32> to vector<8x64xf32>
    %94 = arith.addf %91, %93 : vector<8x64xf32>
    %cst_43 = arith.constant 0.000000e+00 : f32
    %95 = vector.broadcast %cst_43 : f32 to vector<8x64xf32>
    %96 = arith.maximumf %94, %95 : vector<8x64xf32>
    %97 = math.absf %94 : vector<8x64xf32>
    %cst_44 = arith.constant 0.000000e+00 : f32
    %98 = vector.broadcast %cst_44 : f32 to vector<8x64xf32>
    %99 = arith.subf %98, %97 : vector<8x64xf32>
    %100 = math.exp %99 : vector<8x64xf32>
    %cst_45 = arith.constant 1.000000e+00 : f32
    %101 = vector.broadcast %cst_45 : f32 to vector<8x64xf32>
    %102 = arith.addf %101, %100 : vector<8x64xf32>
    %103 = math.log %102 : vector<8x64xf32>
    %104 = arith.addf %96, %103 : vector<8x64xf32>
    %c0_46 = arith.constant 0 : index
    %c0_47 = arith.constant 0 : index
    %105 = vector.load %arg11[%c0_46, %c0_47] : memref<16x64xf32, #tpu.memory_space<vmem>>, vector<16x64xf32>
    %106 = vector.shape_cast %104 : vector<8x64xf32> to vector<8x1x64xf32>
    %107 = vector.shape_cast %105 : vector<16x64xf32> to vector<1x16x64xf32>
    %108 = vector.broadcast %106 : vector<8x1x64xf32> to vector<8x16x64xf32>
    %109 = vector.broadcast %107 : vector<1x16x64xf32> to vector<8x16x64xf32>
    %110 = arith.mulf %108, %109 : vector<8x16x64xf32>
    %111 = math.exp %110 : vector<8x16x64xf32>
    %c0_48 = arith.constant 0 : index
    %c0_49 = arith.constant 0 : index
    %c0_50 = arith.constant 0 : index
    %112 = vector.load %arg16[%c0_48, %c0_49, %c0_50] : memref<8x16x64xf32, #tpu.memory_space<vmem>>, vector<8x16x64xf32>
    tpu.vector_store %arg16[%c0_48, %c0_49, %c0_50], %111 {strides = array<i32>} : memref<8x16x64xf32, #tpu.memory_space<vmem>>, vector<8x16x64xf32>,
    %113 = arith.mulf %104, %82 : vector<8x64xf32>
    %114 = vector.shape_cast %113 : vector<8x64xf32> to vector<8x1x64xf32>
    %115 = vector.shape_cast %87 : vector<8x16xf32> to vector<8x16x1xf32>
    %116 = vector.broadcast %114 : vector<8x1x64xf32> to vector<8x16x64xf32>
    %117 = vector.broadcast %115 : vector<8x16x1xf32> to vector<8x16x64xf32>
    %118 = arith.mulf %116, %117 : vector<8x16x64xf32>
    %c0_51 = arith.constant 0 : index
    %c0_52 = arith.constant 0 : index
    %c0_53 = arith.constant 0 : index
    %119 = vector.load %arg17[%c0_51, %c0_52, %c0_53] : memref<8x16x64xf32, #tpu.memory_space<vmem>>, vector<8x16x64xf32>
    tpu.vector_store %arg17[%c0_51, %c0_52, %c0_53], %118 {strides = array<i32>} : memref<8x16x64xf32, #tpu.memory_space<vmem>>, vector<8x16x64xf32>,
    %c0_54 = arith.constant 0 : index
    %c0_55 = arith.constant 0 : index
    %120 = vector.load %arg18[%c0_54, %c0_55] : memref<8x16xf32, #tpu.memory_space<vmem>>, vector<8x16xf32>
    tpu.vector_store %arg18[%c0_54, %c0_55], %88 {strides = array<i32>} : memref<8x16xf32, #tpu.memory_space<vmem>>, vector<8x16xf32>,
    %cst_56 = arith.constant 0.000000e+00 : f32
    %121 = vector.broadcast %cst_56 : f32 to vector<16x64xf32>
    %c0_i32 = arith.constant 0 : i32
    %c8_i32 = arith.constant 8 : i32
    %122 = arith.addi %c0_i32, %c8_i32 : i32
    %c1_i32_57 = arith.constant 1 : i32
    %123 = scf.for %arg20 = %c0_i32 to %122 step %c1_i32_57 iter_args(%arg21 = %121) -> (vector<16x64xf32>)  : i32 {
      %144 = arith.index_cast %arg20 : i32 to index
      %c0_72 = arith.constant 0 : index
      %c0_73 = arith.constant 0 : index
      %145 = vector.load %arg16[%144, %c0_72, %c0_73] : memref<8x16x64xf32, #tpu.memory_space<vmem>>, vector<1x16x64xf32>
      %146 = vector.shape_cast %145 : vector<1x16x64xf32> to vector<16x64xf32>
      %147 = arith.mulf %arg21, %146 : vector<16x64xf32>
      %148 = arith.index_cast %arg20 : i32 to index
      %c0_74 = arith.constant 0 : index
      %c0_75 = arith.constant 0 : index
      %149 = vector.load %arg17[%148, %c0_74, %c0_75] : memref<8x16x64xf32, #tpu.memory_space<vmem>>, vector<1x16x64xf32>
      %150 = vector.shape_cast %149 : vector<1x16x64xf32> to vector<16x64xf32>
      %151 = arith.addf %147, %150 : vector<16x64xf32>
      %152 = arith.index_cast %arg20 : i32 to index
      %c0_76 = arith.constant 0 : index
      %153 = vector.load %arg18[%152, %c0_76] : memref<8x16xf32, #tpu.memory_space<vmem>>, vector<1x16xf32>
      %cst_77 = arith.constant dense<0.000000e+00> : vector<1x64xf32>
      %154 = tpu.matmul %153, %151, %cst_77 {dimension_numbers = #tpu.dot_dimension_numbers<[1], [0], [0], [1], [0, 0, 1, 1], [], []>} : vector<1x16xf32>, vector<16x64xf32>, vector<1x64xf32> -> vector<1x64xf32>
      %155 = arith.index_cast %arg20 : i32 to index
      %c0_78 = arith.constant 0 : index
      %156 = vector.load %arg19[%155, %c0_78] : memref<8x64xf32, #tpu.memory_space<vmem>>, vector<1x64xf32>
      tpu.vector_store %arg19[%155, %c0_78], %154 {strides = array<i32>} : memref<8x64xf32, #tpu.memory_space<vmem>>, vector<1x64xf32>,
      scf.yield %151 : vector<16x64xf32>
    }
    %c8_i32_58 = arith.constant 8 : i32
    %c0_59 = arith.constant 0 : index
    %c0_60 = arith.constant 0 : index
    %124 = vector.load %arg19[%c0_59, %c0_60] : memref<8x64xf32, #tpu.memory_space<vmem>>, vector<8x64xf32>
    %c0_61 = arith.constant 0 : index
    %c0_62 = arith.constant 0 : index
    %125 = vector.load %arg12[%c0_61, %c0_62] : memref<1x64xf32, #tpu.memory_space<vmem>>, vector<1x64xf32>
    %126 = vector.broadcast %125 : vector<1x64xf32> to vector<8x64xf32>
    %127 = arith.mulf %126, %82 : vector<8x64xf32>
    %128 = arith.addf %124, %127 : vector<8x64xf32>
    %cst_63 = arith.constant 0.000000e+00 : f32
    %129 = vector.broadcast %cst_63 : f32 to vector<8x64xf32>
    %130 = arith.subf %129, %34 : vector<8x64xf32>
    %131 = math.exp %130 : vector<8x64xf32>
    %cst_64 = arith.constant 1.000000e+00 : f32
    %132 = vector.broadcast %cst_64 : f32 to vector<8x64xf32>
    %133 = arith.addf %132, %131 : vector<8x64xf32>
    %cst_65 = arith.constant 1.000000e+00 : f32
    %134 = vector.broadcast %cst_65 : f32 to vector<8x64xf32>
    %135 = arith.divf %134, %133 : vector<8x64xf32>
    %136 = arith.mulf %34, %135 : vector<8x64xf32>
    %137 = arith.mulf %128, %136 : vector<8x64xf32>
    %138 = arith.truncf %137 : vector<8x64xf32> to vector<8x64xbf16>
    %c0_66 = arith.constant 0 : index
    %c0_67 = arith.constant 0 : index
    %139 = vector.load %arg13[%c0_66, %c0_67] : memref<64x32xbf16, #tpu.memory_space<vmem>>, vector<64x32xbf16>
    %cst_68 = arith.constant dense<0.000000e+00> : vector<8x32xf32>
    %140 = tpu.matmul %138, %139, %cst_68 {dimension_numbers = #tpu.dot_dimension_numbers<[1], [0], [0], [1], [0, 0, 1, 1], [], []>} : vector<8x64xbf16>, vector<64x32xbf16>, vector<8x32xf32> -> vector<8x32xf32>
    %c0_69 = arith.constant 0 : index
    %c0_70 = arith.constant 0 : index
    %c0_71 = arith.constant 0 : index
    %141 = vector.load %arg14[%c0_69, %c0_70, %c0_71] : memref<1x8x32xf32, #tpu.memory_space<vmem>>, vector<1x8x32xf32>
    %142 = vector.shape_cast %141 : vector<1x8x32xf32> to vector<8x32xf32>
    %143 = vector.shape_cast %140 : vector<8x32xf32> to vector<1x8x32xf32>
    tpu.vector_store %arg14[%c0_69, %c0_70, %c0_71], %143 {strides = array<i32>} : memref<1x8x32xf32, #tpu.memory_space<vmem>>, vector<1x8x32xf32>,
    return
  }
  func.func @transform_0(%arg0: i32) -> (i32, i32, i32) {
    %c0_i32 = arith.constant 0 : i32
    %c0_i32_0 = arith.constant 0 : i32
    %c0_i32_1 = arith.constant 0 : i32
    return %arg0, %c0_i32, %c0_i32_0 : i32, i32, i32
  }
  func.func @transform_1(%arg0: i32) -> (i32, i32, i32) {
    %c0_i32 = arith.constant 0 : i32
    %c0_i32_0 = arith.constant 0 : i32
    %c0_i32_1 = arith.constant 0 : i32
    return %arg0, %c0_i32, %c0_i32_0 : i32, i32, i32
  }
  func.func @transform_2(%arg0: i32) -> (i32, i32) {
    %c0_i32 = arith.constant 0 : i32
    %c0_i32_0 = arith.constant 0 : i32
    %c0_i32_1 = arith.constant 0 : i32
    return %c0_i32, %c0_i32_0 : i32, i32
  }
  func.func @transform_3(%arg0: i32) -> (i32, i32) {
    %c0_i32 = arith.constant 0 : i32
    %c0_i32_0 = arith.constant 0 : i32
    %c0_i32_1 = arith.constant 0 : i32
    return %c0_i32, %c0_i32_0 : i32, i32
  }
  func.func @transform_4(%arg0: i32) -> (i32, i32) {
    %c0_i32 = arith.constant 0 : i32
    %c0_i32_0 = arith.constant 0 : i32
    %c0_i32_1 = arith.constant 0 : i32
    return %c0_i32, %c0_i32_0 : i32, i32
  }
  func.func @transform_5(%arg0: i32) -> (i32, i32) {
    %c0_i32 = arith.constant 0 : i32
    %c0_i32_0 = arith.constant 0 : i32
    %c0_i32_1 = arith.constant 0 : i32
    return %c0_i32, %c0_i32_0 : i32, i32
  }
  func.func @transform_6(%arg0: i32) -> (i32, i32) {
    %c0_i32 = arith.constant 0 : i32
    %c0_i32_0 = arith.constant 0 : i32
    %c0_i32_1 = arith.constant 0 : i32
    return %c0_i32, %c0_i32_0 : i32, i32
  }
  func.func @transform_7(%arg0: i32) -> (i32, i32) {
    %c0_i32 = arith.constant 0 : i32
    %c0_i32_0 = arith.constant 0 : i32
    %c0_i32_1 = arith.constant 0 : i32
    return %c0_i32, %c0_i32_0 : i32, i32
  }
  func.func @transform_8(%arg0: i32) -> (i32, i32) {
    %c0_i32 = arith.constant 0 : i32
    %c0_i32_0 = arith.constant 0 : i32
    %c0_i32_1 = arith.constant 0 : i32
    return %c0_i32, %c0_i32_0 : i32, i32
  }
  func.func @transform_9(%arg0: i32) -> (i32, i32) {
    %c0_i32 = arith.constant 0 : i32
    %c0_i32_0 = arith.constant 0 : i32
    %c0_i32_1 = arith.constant 0 : i32
    return %c0_i32, %c0_i32_0 : i32, i32
  }
  func.func @transform_10(%arg0: i32) -> (i32, i32) {
    %c0_i32 = arith.constant 0 : i32
    %c0_i32_0 = arith.constant 0 : i32
    %c0_i32_1 = arith.constant 0 : i32
    return %c0_i32, %c0_i32_0 : i32, i32
  }
  func.func @transform_11(%arg0: i32) -> (i32, i32) {
    %c0_i32 = arith.constant 0 : i32
    %c0_i32_0 = arith.constant 0 : i32
    %c0_i32_1 = arith.constant 0 : i32
    return %c0_i32, %c0_i32_0 : i32, i32
  }
  func.func @transform_12(%arg0: i32) -> (i32, i32) {
    %c0_i32 = arith.constant 0 : i32
    %c0_i32_0 = arith.constant 0 : i32
    %c0_i32_1 = arith.constant 0 : i32
    return %c0_i32, %c0_i32_0 : i32, i32
  }
  func.func @transform_13(%arg0: i32) -> (i32, i32, i32) {
    %c0_i32 = arith.constant 0 : i32
    %c0_i32_0 = arith.constant 0 : i32
    %c0_i32_1 = arith.constant 0 : i32
    return %arg0, %c0_i32, %c0_i32_0 : i32, i32, i32
  }
  func.func @transform_14(%arg0: i32) -> (i32, i32, i32) {
    %c0_i32 = arith.constant 0 : i32
    %c0_i32_0 = arith.constant 0 : i32
    %c0_i32_1 = arith.constant 0 : i32
    return %arg0, %c0_i32, %c0_i32_0 : i32, i32, i32
  }
}

</mosaic_0001>

<llo_original>
// kernel: tpu_custom_call.1
$region0: #{tpu_custom_call.1}
  #allocation0 [shape = 'u32[]', space=smem, size = 0x4, offset = 0x4, fixed_abs, tag = 'smem constant byte address 0x4 - core index']
  #allocation1 [shape = 'u32[144,128]{1,0:T(1,128)}', space=vmem, size = 0x12000, scoped, tag = 'internal scratch']
  #allocation2 [shape = 'f32[8,16,64]{2,1,0:T(8,128)}', space=vmem, size = 0x10000, scoped, tag = 'scratch operand']
  #allocation3 [shape = 'f32[8,16,64]{2,1,0:T(8,128)}', space=vmem, size = 0x10000, scoped, tag = 'scratch operand']
  #allocation4 [shape = 'f32[8,16]{1,0:T(8,128)}', space=vmem, size = 0x1000, scoped, tag = 'scratch operand']
  #allocation5 [shape = 'f32[8,64]{1,0:T(8,128)}', space=vmem, size = 0x1000, scoped, tag = 'scratch operand']
  %s0 = inlined_call_operand.vmem [shape: f32[2,8,32], index: 0, kind: input, shape index: {}]
  %s1 = inlined_call_operand.vmem [shape: f32[2,8,32], index: 1, kind: input, shape index: {}]
  %s2 = inlined_call_operand.vmem [shape: f32[1,32], index: 2, kind: input, shape index: {}]
  %s3 = inlined_call_operand.vmem [shape: f32[1,32], index: 3, kind: input, shape index: {}]
  %s4 = inlined_call_operand.vmem [shape: bf16[32,128], index: 4, kind: input, shape index: {}]
  %s5 = inlined_call_operand.vmem [shape: f32[4,64], index: 5, kind: input, shape index: {}]
  %s6 = inlined_call_operand.vmem [shape: f32[1,64], index: 6, kind: input, shape index: {}]
  %s7 = inlined_call_operand.vmem [shape: bf16[64,34], index: 7, kind: input, shape index: {}]
  %s8 = inlined_call_operand.vmem [shape: bf16[2,64], index: 8, kind: input, shape index: {}]
  %s9 = inlined_call_operand.vmem [shape: f32[1,64], index: 9, kind: input, shape index: {}]
  %s10 = inlined_call_operand.vmem [shape: f32[16,64], index: 10, kind: input, shape index: {}]
  %s11 = inlined_call_operand.vmem [shape: f32[1,64], index: 11, kind: input, shape index: {}]
  %s12 = inlined_call_operand.vmem [shape: bf16[64,32], index: 12, kind: input, shape index: {}]
  %s13 = inlined_call_operand.hbm [shape: f32[2,8,32], index: 13, kind: output, shape index: {0}]
  %s14 = inlined_call_operand.hbm [shape: f32[2,8,32], index: 14, kind: output, shape index: {1}]
  %15 = xla_tuple %s13, %s14
  %s16 = sld [smem:[#allocation0]]
  $region100: #{tpu_custom_call.1} parent=0
    _
  %s18 = ssub.s32 1, %s16
  %s19 = scalar_select 0, %s18, %s16
  $region1: #{tpu_custom_call.1} parent=0
    #allocation6 [shape = 'u8[8192]{0}', space=vmem, size = 0x2000, scoped, tag = 'output window, operand 0']
    #allocation7 [shape = 's32[2]{0}', space=sflag, size = 0x8, scoped, tag = 'scoped memory for tpu_custom_call.1']
    #allocation8 [shape = 'u8[8192]{0}', space=vmem, size = 0x2000, scoped, tag = 'output window, operand 1']
    #allocation9 [shape = 's32[2]{0}', space=sflag, size = 0x8, scoped, tag = 'scoped memory for tpu_custom_call.1']
    %20 = vsyncpa [#allocation7], 0
    %s21 = scalar_lea.sflag [#allocation7], 1
    %22 = vsyncpa %s21, 0
    %23 = vsyncpa [#allocation9], 0
    %s24 = scalar_lea.sflag [#allocation9], 1
    %25 = vsyncpa %s24, 0
    loop: start=0, step=1, limit=4
    $region2: #{tpu_custom_call.1} parent=1 // loop_pre_header
      _
    $region3: #{tpu_custom_call.1} parent=1 // loop_header
      %s27 = sphi 0, %s31
      %p28 = scmp.ge.s32.totalorder %s27, 4
      %s37 = sphi 0, %s39
      %s40 = sphi 0, %s37
      %s41 = sphi 0, %s40
      %s57 = sphi 0, %s41
      %s63 = sphi 0, %s65
      %s66 = sphi 0, %s63
      %s67 = sphi 0, %s66
      %s83 = sphi 0, %s67
      %s87 = sphi 0, %s87
      %s89 = sphi 0, %s87
      %s90 = sphi 0, %s89
      %s104 = sphi 0, %s90
      %s108 = sphi 0, %s108
      %s110 = sphi 0, %s108
      %s111 = sphi 0, %s110
      %s125 = sphi 0, %s111
      %s129 = sphi 0, %s129
      %s131 = sphi 0, %s129
      %s132 = sphi 0, %s131
      %s146 = sphi 0, %s132
      %s150 = sphi 0, %s150
      %s152 = sphi 0, %s150
      %s153 = sphi 0, %s152
      %s167 = sphi 0, %s153
      %s171 = sphi 0, %s171
      %s173 = sphi 0, %s171
      %s174 = sphi 0, %s173
      %s188 = sphi 0, %s174
      %s192 = sphi 0, %s192
      %s194 = sphi 0, %s192
      %s195 = sphi 0, %s194
      %s209 = sphi 0, %s195
      %s213 = sphi 0, %s213
      %s215 = sphi 0, %s213
      %s216 = sphi 0, %s215
      %s230 = sphi 0, %s216
      %s234 = sphi 0, %s234
      %s236 = sphi 0, %s234
      %s237 = sphi 0, %s236
      %s251 = sphi 0, %s237
      %s255 = sphi 0, %s255
      %s257 = sphi 0, %s255
      %s258 = sphi 0, %s257
      %s272 = sphi 0, %s258
      %s276 = sphi 0, %s276
      %s278 = sphi 0, %s276
      %s279 = sphi 0, %s278
      %s293 = sphi 0, %s279
      %s297 = sphi 0, %s297
      %s299 = sphi 0, %s297
      %s300 = sphi 0, %s299
      %s314 = sphi 0, %s300
      %s320 = sphi 0, %s322
      %s323 = sphi 0, %s320
      %s324 = sphi 0, %s323
      %s340 = sphi 0, %s324
      %s346 = sphi 0, %s348
      %s349 = sphi 0, %s346
      %s350 = sphi 0, %s349
      %s366 = sphi 0, %s350
    $region4: #{tpu_custom_call.1} parent=1 // loop_header_branch
      %30 = sbr.rel (%p28) target = $region8
    $region5: #{tpu_custom_call.1} parent=1 // loop_body
      %s32 = ssub.s32 %s27, 1
      %s33 = ssub.s32 %s27, 2
      %s34 = sadd.s32 %s27, 1
      %s35 = ssub.s32 %s27, %s34
      %p36 = scmp.eq.s32.totalorder %s35, 0
      %s38 = sadd.s32 %s37, 1
      %s39 = scalar_select %p36, %s37, %s38
      %p42 = pneg %p36
      %p43 = scmp.eq.s32.totalorder %s27, 1
      %p44 = por %p42, %p43
      %p45 = scmp.ne.s32.totalorder %s37, %s40
      %p46 = scmp.eq.s32.totalorder %s27, 0
      %p47 = por %p45, %p46
      %p48 = scmp.ne.s32.totalorder %s37, %s40
      %p49 = scmp.eq.s32.totalorder %s32, 1
      %p50 = por %p48, %p49
      %p51 = scmp.ne.s32.totalorder %s40, %s41
      %p52 = scmp.eq.s32.totalorder %s32, 0
      %p53 = por %p51, %p52
      %p54 = scmp.ne.s32.totalorder %s40, %s41
      %p55 = scmp.eq.s32.totalorder %s33, 1
      %p56 = por %p54, %p55
      %p58 = scmp.ne.s32.totalorder %s41, %s57
      %p59 = scmp.eq.s32.totalorder %s33, 0
      %p60 = por %p58, %p59
      %s61 = ssub.s32 %s27, %s34
      %p62 = scmp.eq.s32.totalorder %s61, 0
      %s64 = sadd.s32 %s63, 1
      %s65 = scalar_select %p62, %s63, %s64
      %p68 = pneg %p62
      %p69 = scmp.eq.s32.totalorder %s27, 1
      %p70 = por %p68, %p69
      %p71 = scmp.ne.s32.totalorder %s63, %s66
      %p72 = scmp.eq.s32.totalorder %s27, 0
      %p73 = por %p71, %p72
      %p74 = scmp.ne.s32.totalorder %s63, %s66
      %p75 = scmp.eq.s32.totalorder %s32, 1
      %p76 = por %p74, %p75
      %p77 = scmp.ne.s32.totalorder %s66, %s67
      %p78 = scmp.eq.s32.totalorder %s32, 0
      %p79 = por %p77, %p78
      %p80 = scmp.ne.s32.totalorder %s66, %s67
      %p81 = scmp.eq.s32.totalorder %s33, 1
      %p82 = por %p80, %p81
      %p84 = scmp.ne.s32.totalorder %s67, %s83
      %p85 = scmp.eq.s32.totalorder %s33, 0
      %p86 = por %p84, %p85
      %s88 = sadd.s32 %s87, 1
      %p91 = scmp.eq.s32.totalorder %s27, 1
      %p92 = scmp.ne.s32.totalorder %s87, %s89
      %p93 = scmp.eq.s32.totalorder %s27, 0
      %p94 = por %p92, %p93
      %p95 = scmp.ne.s32.totalorder %s87, %s89
      %p96 = scmp.eq.s32.totalorder %s32, 1
      %p97 = por %p95, %p96
      %p98 = scmp.ne.s32.totalorder %s89, %s90
      %p99 = scmp.eq.s32.totalorder %s32, 0
      %p100 = por %p98, %p99
      %p101 = scmp.ne.s32.totalorder %s89, %s90
      %p102 = scmp.eq.s32.totalorder %s33, 1
      %p103 = por %p101, %p102
      %p105 = scmp.ne.s32.totalorder %s90, %s104
      %p106 = scmp.eq.s32.totalorder %s33, 0
      %p107 = por %p105, %p106
      %s109 = sadd.s32 %s108, 1
      %p112 = scmp.eq.s32.totalorder %s27, 1
      %p113 = scmp.ne.s32.totalorder %s108, %s110
      %p114 = scmp.eq.s32.totalorder %s27, 0
      %p115 = por %p113, %p114
      %p116 = scmp.ne.s32.totalorder %s108, %s110
      %p117 = scmp.eq.s32.totalorder %s32, 1
      %p118 = por %p116, %p117
      %p119 = scmp.ne.s32.totalorder %s110, %s111
      %p120 = scmp.eq.s32.totalorder %s32, 0
      %p121 = por %p119, %p120
      %p122 = scmp.ne.s32.totalorder %s110, %s111
      %p123 = scmp.eq.s32.totalorder %s33, 1
      %p124 = por %p122, %p123
      %p126 = scmp.ne.s32.totalorder %s111, %s125
      %p127 = scmp.eq.s32.totalorder %s33, 0
      %p128 = por %p126, %p127
      %s130 = sadd.s32 %s129, 1
      %p133 = scmp.eq.s32.totalorder %s27, 1
      %p134 = scmp.ne.s32.totalorder %s129, %s131
      %p135 = scmp.eq.s32.totalorder %s27, 0
      %p136 = por %p134, %p135
      %p137 = scmp.ne.s32.totalorder %s129, %s131
      %p138 = scmp.eq.s32.totalorder %s32, 1
      %p139 = por %p137, %p138
      %p140 = scmp.ne.s32.totalorder %s131, %s132
      %p141 = scmp.eq.s32.totalorder %s32, 0
      %p142 = por %p140, %p141
      %p143 = scmp.ne.s32.totalorder %s131, %s132
      %p144 = scmp.eq.s32.totalorder %s33, 1
      %p145 = por %p143, %p144
      %p147 = scmp.ne.s32.totalorder %s132, %s146
      %p148 = scmp.eq.s32.totalorder %s33, 0
      %p149 = por %p147, %p148
      %s151 = sadd.s32 %s150, 1
      %p154 = scmp.eq.s32.totalorder %s27, 1
      %p155 = scmp.ne.s32.totalorder %s150, %s152
      %p156 = scmp.eq.s32.totalorder %s27, 0
      %p157 = por %p155, %p156
      %p158 = scmp.ne.s32.totalorder %s150, %s152
      %p159 = scmp.eq.s32.totalorder %s32, 1
      %p160 = por %p158, %p159
      %p161 = scmp.ne.s32.totalorder %s152, %s153
      %p162 = scmp.eq.s32.totalorder %s32, 0
      %p163 = por %p161, %p162
      %p164 = scmp.ne.s32.totalorder %s152, %s153
      %p165 = scmp.eq.s32.totalorder %s33, 1
      %p166 = por %p164, %p165
      %p168 = scmp.ne.s32.totalorder %s153, %s167
      %p169 = scmp.eq.s32.totalorder %s33, 0
      %p170 = por %p168, %p169
      %s172 = sadd.s32 %s171, 1
      %p175 = scmp.eq.s32.totalorder %s27, 1
      %p176 = scmp.ne.s32.totalorder %s171, %s173
      %p177 = scmp.eq.s32.totalorder %s27, 0
      %p178 = por %p176, %p177
      %p179 = scmp.ne.s32.totalorder %s171, %s173
      %p180 = scmp.eq.s32.totalorder %s32, 1
      %p181 = por %p179, %p180
      %p182 = scmp.ne.s32.totalorder %s173, %s174
      %p183 = scmp.eq.s32.totalorder %s32, 0
      %p184 = por %p182, %p183
      %p185 = scmp.ne.s32.totalorder %s173, %s174
      %p186 = scmp.eq.s32.totalorder %s33, 1
      %p187 = por %p185, %p186
      %p189 = scmp.ne.s32.totalorder %s174, %s188
      %p190 = scmp.eq.s32.totalorder %s33, 0
      %p191 = por %p189, %p190
      %s193 = sadd.s32 %s192, 1
      %p196 = scmp.eq.s32.totalorder %s27, 1
      %p197 = scmp.ne.s32.totalorder %s192, %s194
      %p198 = scmp.eq.s32.totalorder %s27, 0
      %p199 = por %p197, %p198
      %p200 = scmp.ne.s32.totalorder %s192, %s194
      %p201 = scmp.eq.s32.totalorder %s32, 1
      %p202 = por %p200, %p201
      %p203 = scmp.ne.s32.totalorder %s194, %s195
      %p204 = scmp.eq.s32.totalorder %s32, 0
      %p205 = por %p203, %p204
      %p206 = scmp.ne.s32.totalorder %s194, %s195
      %p207 = scmp.eq.s32.totalorder %s33, 1
      %p208 = por %p206, %p207
      %p210 = scmp.ne.s32.totalorder %s195, %s209
      %p211 = scmp.eq.s32.totalorder %s33, 0
      %p212 = por %p210, %p211
      %s214 = sadd.s32 %s213, 1
      %p217 = scmp.eq.s32.totalorder %s27, 1
      %p218 = scmp.ne.s32.totalorder %s213, %s215
      %p219 = scmp.eq.s32.totalorder %s27, 0
      %p220 = por %p218, %p219
      %p221 = scmp.ne.s32.totalorder %s213, %s215
      %p222 = scmp.eq.s32.totalorder %s32, 1
      %p223 = por %p221, %p222
      %p224 = scmp.ne.s32.totalorder %s215, %s216
      %p225 = scmp.eq.s32.totalorder %s32, 0
      %p226 = por %p224, %p225
      %p227 = scmp.ne.s32.totalorder %s215, %s216
      %p228 = scmp.eq.s32.totalorder %s33, 1
      %p229 = por %p227, %p228
      %p231 = scmp.ne.s32.totalorder %s216, %s230
      %p232 = scmp.eq.s32.totalorder %s33, 0
      %p233 = por %p231, %p232
      %s235 = sadd.s32 %s234, 1
      %p238 = scmp.eq.s32.totalorder %s27, 1
      %p239 = scmp.ne.s32.totalorder %s234, %s236
      %p240 = scmp.eq.s32.totalorder %s27, 0
      %p241 = por %p239, %p240
      %p242 = scmp.ne.s32.totalorder %s234, %s236
      %p243 = scmp.eq.s32.totalorder %s32, 1
      %p244 = por %p242, %p243
      %p245 = scmp.ne.s32.totalorder %s236, %s237
      %p246 = scmp.eq.s32.totalorder %s32, 0
      %p247 = por %p245, %p246
      %p248 = scmp.ne.s32.totalorder %s236, %s237
      %p249 = scmp.eq.s32.totalorder %s33, 1
      %p250 = por %p248, %p249
      %p252 = scmp.ne.s32.totalorder %s237, %s251
      %p253 = scmp.eq.s32.totalorder %s33, 0
      %p254 = por %p252, %p253
      %s256 = sadd.s32 %s255, 1
      %p259 = scmp.eq.s32.totalorder %s27, 1
      %p260 = scmp.ne.s32.totalorder %s255, %s257
      %p261 = scmp.eq.s32.totalorder %s27, 0
      %p262 = por %p260, %p261
      %p263 = scmp.ne.s32.totalorder %s255, %s257
      %p264 = scmp.eq.s32.totalorder %s32, 1
      %p265 = por %p263, %p264
      %p266 = scmp.ne.s32.totalorder %s257, %s258
      %p267 = scmp.eq.s32.totalorder %s32, 0
      %p268 = por %p266, %p267
      %p269 = scmp.ne.s32.totalorder %s257, %s258
      %p270 = scmp.eq.s32.totalorder %s33, 1
      %p271 = por %p269, %p270
      %p273 = scmp.ne.s32.totalorder %s258, %s272
      %p274 = scmp.eq.s32.totalorder %s33, 0
      %p275 = por %p273, %p274
      %s277 = sadd.s32 %s276, 1
      %p280 = scmp.eq.s32.totalorder %s27, 1
      %p281 = scmp.ne.s32.totalorder %s276, %s278
      %p282 = scmp.eq.s32.totalorder %s27, 0
      %p283 = por %p281, %p282
      %p284 = scmp.ne.s32.totalorder %s276, %s278
      %p285 = scmp.eq.s32.totalorder %s32, 1
      %p286 = por %p284, %p285
      %p287 = scmp.ne.s32.totalorder %s278, %s279
      %p288 = scmp.eq.s32.totalorder %s32, 0
      %p289 = por %p287, %p288
      %p290 = scmp.ne.s32.totalorder %s278, %s279
      %p291 = scmp.eq.s32.totalorder %s33, 1
      %p292 = por %p290, %p291
      %p294 = scmp.ne.s32.totalorder %s279, %s293
      %p295 = scmp.eq.s32.totalorder %s33, 0
      %p296 = por %p294, %p295
      %s298 = sadd.s32 %s297, 1
      %p301 = scmp.eq.s32.totalorder %s27, 1
      %p302 = scmp.ne.s32.totalorder %s297, %s299
      %p303 = scmp.eq.s32.totalorder %s27, 0
      %p304 = por %p302, %p303
      %p305 = scmp.ne.s32.totalorder %s297, %s299
      %p306 = scmp.eq.s32.totalorder %s32, 1
      %p307 = por %p305, %p306
      %p308 = scmp.ne.s32.totalorder %s299, %s300
      %p309 = scmp.eq.s32.totalorder %s32, 0
      %p310 = por %p308, %p309
      %p311 = scmp.ne.s32.totalorder %s299, %s300
      %p312 = scmp.eq.s32.totalorder %s33, 1
      %p313 = por %p311, %p312
      %p315 = scmp.ne.s32.totalorder %s300, %s314
      %p316 = scmp.eq.s32.totalorder %s33, 0
      %p317 = por %p315, %p316
      %s318 = ssub.s32 %s27, %s34
      %p319 = scmp.eq.s32.totalorder %s318, 0
      %s321 = sadd.s32 %s320, 1
      %s322 = scalar_select %p319, %s320, %s321
      %p325 = pneg %p319
      %p326 = scmp.eq.s32.totalorder %s27, 1
      %p327 = por %p325, %p326
      %p328 = scmp.ne.s32.totalorder %s320, %s323
      %p329 = scmp.eq.s32.totalorder %s27, 0
      %p330 = por %p328, %p329
      %p331 = scmp.ne.s32.totalorder %s320, %s323
      %p332 = scmp.eq.s32.totalorder %s32, 1
      %p333 = por %p331, %p332
      %p334 = scmp.ne.s32.totalorder %s323, %s324
      %p335 = scmp.eq.s32.totalorder %s32, 0
      %p336 = por %p334, %p335
      %p337 = scmp.ne.s32.totalorder %s323, %s324
      %p338 = scmp.eq.s32.totalorder %s33, 1
      %p339 = por %p337, %p338
      %p341 = scmp.ne.s32.totalorder %s324, %s340
      %p342 = scmp.eq.s32.totalorder %s33, 0
      %p343 = por %p341, %p342
      %s344 = ssub.s32 %s27, %s34
      %p345 = scmp.eq.s32.totalorder %s344, 0
      %s347 = sadd.s32 %s346, 1
      %s348 = scalar_select %p345, %s346, %s347
      %p351 = pneg %p345
      %p352 = scmp.eq.s32.totalorder %s27, 1
      %p353 = por %p351, %p352
      %p354 = scmp.ne.s32.totalorder %s346, %s349
      %p355 = scmp.eq.s32.totalorder %s27, 0
      %p356 = por %p354, %p355
      %p357 = scmp.ne.s32.totalorder %s346, %s349
      %p358 = scmp.eq.s32.totalorder %s32, 1
      %p359 = por %p357, %p358
      %p360 = scmp.ne.s32.totalorder %s349, %s350
      %p361 = scmp.eq.s32.totalorder %s32, 0
      %p362 = por %p360, %p361
      %p363 = scmp.ne.s32.totalorder %s349, %s350
      %p364 = scmp.eq.s32.totalorder %s33, 1
      %p365 = por %p363, %p364
      %p367 = scmp.ne.s32.totalorder %s350, %s366
      %p368 = scmp.eq.s32.totalorder %s33, 0
      %p369 = por %p367, %p368
      %p370 = scmp.le.s32.totalorder 1, %s27
      %p371 = scmp.lt.s32.totalorder %s27, 3
      %p372 = pnand %p370, %p371
      %p373 = pneg %p372
      // Predicated region
      $region9: #{tpu_custom_call.1} parent=5 // pred_check
        _
      $region10: #{tpu_custom_call.1} parent=5 // pred_check_branch
        %375 = sbr.rel (%p372) target = $region12
      $region11: #{tpu_custom_call.1} parent=5 // pred_region
        %s376 = ssub.s32 %s27, 1
        // Predicated region
        $region13: #{tpu_custom_call.1} parent=11 // pred_check
          %p377 = pneg %p100
        $region14: #{tpu_custom_call.1} parent=11 // pred_check_branch
          %379 = sbr.rel (%p377) target = $region16
        $region15: #{tpu_custom_call.1} parent=11 // pred_region
          _
        $region16: #{tpu_custom_call.1} parent=11 // pred_fallthru
          _
        // Predicated region
        $region17: #{tpu_custom_call.1} parent=11 // pred_check
          %p380 = pneg %p121
        $region18: #{tpu_custom_call.1} parent=11 // pred_check_branch
          %382 = sbr.rel (%p380) target = $region20
        $region19: #{tpu_custom_call.1} parent=11 // pred_region
          _
        $region20: #{tpu_custom_call.1} parent=11 // pred_fallthru
          _
        // Predicated region
        $region21: #{tpu_custom_call.1} parent=11 // pred_check
          %p383 = pneg %p142
        $region22: #{tpu_custom_call.1} parent=11 // pred_check_branch
          %385 = sbr.rel (%p383) target = $region24
        $region23: #{tpu_custom_call.1} parent=11 // pred_region
          _
        $region24: #{tpu_custom_call.1} parent=11 // pred_fallthru
          _
        // Predicated region
        $region25: #{tpu_custom_call.1} parent=11 // pred_check
          %p386 = pneg %p163
        $region26: #{tpu_custom_call.1} parent=11 // pred_check_branch
          %388 = sbr.rel (%p386) target = $region28
        $region27: #{tpu_custom_call.1} parent=11 // pred_region
          _
        $region28: #{tpu_custom_call.1} parent=11 // pred_fallthru
          _
        // Predicated region
        $region29: #{tpu_custom_call.1} parent=11 // pred_check
          %p389 = pneg %p184
        $region30: #{tpu_custom_call.1} parent=11 // pred_check_branch
          %391 = sbr.rel (%p389) target = $region32
        $region31: #{tpu_custom_call.1} parent=11 // pred_region
          _
        $region32: #{tpu_custom_call.1} parent=11 // pred_fallthru
          _
        // Predicated region
        $region33: #{tpu_custom_call.1} parent=11 // pred_check
          %p392 = pneg %p205
        $region34: #{tpu_custom_call.1} parent=11 // pred_check_branch
          %394 = sbr.rel (%p392) target = $region36
        $region35: #{tpu_custom_call.1} parent=11 // pred_region
          _
        $region36: #{tpu_custom_call.1} parent=11 // pred_fallthru
          _
        // Predicated region
        $region37: #{tpu_custom_call.1} parent=11 // pred_check
          %p395 = pneg %p226
        $region38: #{tpu_custom_call.1} parent=11 // pred_check_branch
          %397 = sbr.rel (%p395) target = $region40
        $region39: #{tpu_custom_call.1} parent=11 // pred_region
          _
        $region40: #{tpu_custom_call.1} parent=11 // pred_fallthru
          _
        // Predicated region
        $region41: #{tpu_custom_call.1} parent=11 // pred_check
          %p398 = pneg %p247
        $region42: #{tpu_custom_call.1} parent=11 // pred_check_branch
          %400 = sbr.rel (%p398) target = $region44
        $region43: #{tpu_custom_call.1} parent=11 // pred_region
          _
        $region44: #{tpu_custom_call.1} parent=11 // pred_fallthru
          _
        // Predicated region
        $region45: #{tpu_custom_call.1} parent=11 // pred_check
          %p401 = pneg %p268
        $region46: #{tpu_custom_call.1} parent=11 // pred_check_branch
          %403 = sbr.rel (%p401) target = $region48
        $region47: #{tpu_custom_call.1} parent=11 // pred_region
          _
        $region48: #{tpu_custom_call.1} parent=11 // pred_fallthru
          _
        // Predicated region
        $region49: #{tpu_custom_call.1} parent=11 // pred_check
          %p404 = pneg %p289
        $region50: #{tpu_custom_call.1} parent=11 // pred_check_branch
          %406 = sbr.rel (%p404) target = $region52
        $region51: #{tpu_custom_call.1} parent=11 // pred_region
          _
        $region52: #{tpu_custom_call.1} parent=11 // pred_fallthru
          _
        // Predicated region
        $region53: #{tpu_custom_call.1} parent=11 // pred_check
          %p407 = pneg %p310
        $region54: #{tpu_custom_call.1} parent=11 // pred_check_branch
          %409 = sbr.rel (%p407) target = $region56
        $region55: #{tpu_custom_call.1} parent=11 // pred_region
          _
        $region56: #{tpu_custom_call.1} parent=11 // pred_fallthru
          _
      $region12: #{tpu_custom_call.1} parent=5 // pred_fallthru
        _
      %p410 = scmp.lt.s32.totalorder %s27, 2
      // Predicated region
      $region57: #{tpu_custom_call.1} parent=5 // pred_check
        %p411 = pneg %p410
      $region58: #{tpu_custom_call.1} parent=5 // pred_check_branch
        %413 = sbr.rel (%p411) target = $region60
      $region59: #{tpu_custom_call.1} parent=5 // pred_region
        // Predicated region
        $region61: #{tpu_custom_call.1} parent=59 // pred_check
          %p414 = pneg %p47
        $region62: #{tpu_custom_call.1} parent=59 // pred_check_branch
          %416 = sbr.rel (%p414) target = $region64
        $region63: #{tpu_custom_call.1} parent=59 // pred_region
          %p417 = scmp.lt.s32.totalorder %s27, 1
          %s418 = scalar_select %p417, %s27, 1
          %s419 = smul.addr %s418, 8
          %s420 = scalar_lea.vmem %s0, %s419
        $region64: #{tpu_custom_call.1} parent=59 // pred_fallthru
          _
        // Predicated region
        $region65: #{tpu_custom_call.1} parent=59 // pred_check
          %p421 = pneg %p73
        $region66: #{tpu_custom_call.1} parent=59 // pred_check_branch
          %423 = sbr.rel (%p421) target = $region68
        $region67: #{tpu_custom_call.1} parent=59 // pred_region
          %p424 = scmp.lt.s32.totalorder %s27, 1
          %s425 = scalar_select %p424, %s27, 1
          %s426 = smul.addr %s425, 8
          %s427 = scalar_lea.vmem %s1, %s426
        $region68: #{tpu_custom_call.1} parent=59 // pred_fallthru
          _
      $region60: #{tpu_custom_call.1} parent=5 // pred_fallthru
        _
      %p428 = scmp.le.s32.totalorder 1, %s27
      %p429 = scmp.lt.s32.totalorder %s27, 3
      %p430 = pnand %p428, %p429
      %p431 = pneg %p430
      // Predicated region
      $region69: #{tpu_custom_call.1} parent=5 // pred_check
        _
      $region70: #{tpu_custom_call.1} parent=5 // pred_check_branch
        %433 = sbr.rel (%p430) target = $region72
      $region71: #{tpu_custom_call.1} parent=5 // pred_region
        %s434 = ssub.s32 %s27, 1
        %p435 = scmp.lt.s32.totalorder %s32, 1
        %s436 = scalar_select %p435, %s32, 1
        %s437 = smul.addr %s436, 8
        %s438 = scalar_lea.vmem %s0, %s437
        %p439 = pneg %p53
        %p440 = pneg %p50
        %p441 = scmp.lt.s32.totalorder %s32, 1
        %s442 = scalar_select %p441, %s32, 1
        %s443 = smul.addr %s442, 8
        %s444 = scalar_lea.vmem %s1, %s443
        %p445 = pneg %p79
        %p446 = pneg %p76
        %p447 = pneg %p100
        %p448 = pneg %p97
        %p449 = pneg %p121
        %p450 = pneg %p118
        %p451 = pneg %p142
        %p452 = pneg %p139
        %p453 = pneg %p163
        %p454 = pneg %p160
        %p455 = pneg %p184
        %p456 = pneg %p181
        %p457 = pneg %p205
        %p458 = pneg %p202
        %p459 = pneg %p226
        %p460 = pneg %p223
        %p461 = pneg %p247
        %p462 = pneg %p244
        %p463 = pneg %p268
        %p464 = pneg %p265
        %p465 = pneg %p289
        %p466 = pneg %p286
        %p467 = pneg %p310
        %p468 = pneg %p307
        %p469 = pneg %p336
        %p470 = pneg %p333
        %s471 = sand.u32 %s323, 1
        %s472 = scalar_lea.sflag [#allocation7], %s471
        %s473 = sand.u32 %s323, 1
        %s474 = smul.addr %s473, 8
        %s475 = scalar_lea.vmem [#allocation6], %s474
        %p476 = pneg %p362
        %p477 = pneg %p359
        %s478 = sand.u32 %s349, 1
        %s479 = scalar_lea.sflag [#allocation9], %s478
        %s480 = sand.u32 %s349, 1
        %s481 = smul.addr %s480, 8
        %s482 = scalar_lea.vmem [#allocation8], %s481
        %p483 = scmp.lt.s32.totalorder %s32, 1
        %s484 = scalar_select %p483, %s32, 1
        %s485 = smul.addr %s484, 8
        %s486 = scalar_lea.vmem %s0, %s485
        %p487 = scmp.lt.s32.totalorder %s32, 1
        %s488 = scalar_select %p487, %s32, 1
        %s489 = smul.addr %s488, 8
        %s490 = scalar_lea.vmem %s1, %s489
        %v492 = vld [vmem:[%s486] sm:$0xff]
        %v493 = vld [vmem:[%s490] sm:$0xff]
        %v494 = vadd.f32 %v492, %v493
        %vm495 = vcmask 261120
        %496 = vst.msk [vmem:[%s482] sm:$0xff] %vm495, %v494
        %v497 = vsel %vm495, %v494, 0.0
        %498 = vadd.xlane.f32.xlu0 %v497
        %v499 = vpop.xlane.xlu0 %498
        %v500 = vrcp.pop 32.0
        %v501 = vmul.f32 %v499, %v500
        %v502 = vsub.f32 %v494, %v501
        %v503 = vmul.f32 %v502, %v502
        %v504 = vsel %vm495, %v503, 0.0
        %505 = vadd.xlane.f32.xlu0 %v504
        %v506 = vpop.xlane.xlu0 %505
        %v507 = vmul.f32 %v506, %v500
        %v508 = vadd.f32 %v507, 1e-05
        %v509 = vrsqrt.pop %v508
        %v510 = vmul.f32 %v502, %v509
        %v511 = vld [vmem:[%s2] sm:$0x1]
        %v513 = vlaneseq
        %v514 = vshrl.u32 %v513, 7
        %v515 = vsub.s32 0, %v514
        %v516 = vrot.slane %v511, %v515
        %v518 = vmul.f32 %v510, %v516
        %v519 = vld [vmem:[%s3] sm:$0x1]
        %v521 = vlaneseq
        %v522 = vshrl.u32 %v521, 7
        %v523 = vsub.s32 0, %v522
        %v524 = vrot.slane %v519, %v523
        %v526 = vadd.f32 %v518, %v524
        %v527 = vpack.c.bf16 %v526, %v526
        %v528 = vld [vmem:[%s4] sm:$0xf]
        %v529 = vld [vmem:[%s4 + $0x4] sm:$0xf]
        %v530 = vld [vmem:[%s4 + $0x8] sm:$0xf]
        %v531 = vld [vmem:[%s4 + $0xc] sm:$0xf]
        %v536 = vunpack.c.l.b16 %v528
        %v537 = vunpack.c.l.b16 %v529
        %v538 = vunpack.c.l.b16 %v530
        %v539 = vunpack.c.l.b16 %v531
        %v540 = vpack.c.b16 %v537, %v536
        %v541 = vpack.c.b16 %v539, %v538
        %v545 = vsel %vm495, %v527, 0
        %547 = vmatprep.subr.bf16.mxu0 0
        %548 = vmatpush1.bf16.msra.mxu0 %v540
        %549 = vmatprep.subr.bf16.mxu0 0
        %550 = vmatpush1.bf16.msra.mxu0 %v541
        %551 = vmatprep.subr.bf16.mxu0 0
        %552 = vmatpush1.bf16.msra.mxu0 0
        %553 = vmatprep.subr.bf16.mxu0 0
        %554 = vmatpush1.bf16.msra.mxu0 0
        %555 = vmatprep.subr.bf16.mxu0 0
        %556 = vmatpush1.bf16.msra.mxu0 0
        %557 = vmatprep.subr.bf16.mxu0 0
        %558 = vmatpush1.bf16.msra.mxu0 0
        %559 = vmatprep.subr.bf16.mxu0 0
        %560 = vmatpush1.bf16.msra.mxu0 0
        %561 = vmatprep.subr.bf16.mxu0 0
        %562 = vmatpush1.bf16.msra.mxu0 0
        %563 = vmatprep.subr.bf16.mxu0 0
        %564 = vmatpush1.bf16.msra.mxu0 0
        %565 = vmatprep.subr.bf16.mxu0 0
        %566 = vmatpush1.bf16.msra.mxu0 0
        %567 = vmatprep.subr.bf16.mxu0 0
        %568 = vmatpush1.bf16.msra.mxu0 0
        %569 = vmatprep.subr.bf16.mxu0 0
        %570 = vmatpush1.bf16.msra.mxu0 0
        %571 = vmatprep.subr.bf16.mxu0 0
        %572 = vmatpush1.bf16.msra.mxu0 0
        %573 = vmatprep.subr.bf16.mxu0 0
        %574 = vmatpush1.bf16.msra.mxu0 0
        %575 = vmatprep.subr.bf16.mxu0 0
        %576 = vmatpush1.bf16.msra.mxu0 0
        %577 = vmatprep.subr.bf16.mxu0 0
        %578 = vmatpush1.bf16.msra.mxu0 0
        %579 = vmatprep.mubr.bf16.mxu0 0
        %580 = vmatmul.mubr.bf16.gmra.mrb[0].mxu0 %v545
        %v581 = vpop.f32.mrb[0].mxu0
        %v582 = vadd.f32 0.0, %v581
        %v583 = vpop.f32.mrb[0].mxu0
        %v584 = vpop.f32.mrb[0].mxu0
        %v585 = vpop.f32.mrb[0].mxu0
        %586 = vdwg.mxu0
        %v587 = vlaneseq
        %v588 = vshrl.u32 %v587, 7
        %v589 = vld [vmem:[%s5 + $0x3] sm:$0x1]
        %v590 = vlaneseq
        %v591 = vshrl.u32 %v590, 7
        %v592 = vsub.s32 0, %v591
        %v593 = vrot.slane %v589, %v592
        %v594 = vmul.f32 %v582, %v593
        %v595 = vld [vmem:[%s6] sm:$0x1]
        %v597 = vlaneseq
        %v598 = vshrl.u32 %v597, 7
        %v599 = vsub.s32 0, %v598
        %v600 = vrot.slane %v595, %v599
        %v602 = vadd.f32 %v594, %v600
        %vm603 = vcmp.lt.s32.totalorder %v588, 3
        %v604 = vrot.slane %v582, 5
        %v605 = vsel %vm603, 1, 0
        %vm606 = vcmp.eq.s32.totalorder %v605, 1
        %v607 = vsel %vm606, 0.0, %v604
        %v608 = vld [vmem:[%s5] sm:$0x1]
        %v609 = vlaneseq
        %v610 = vshrl.u32 %v609, 7
        %v611 = vsub.s32 0, %v610
        %v612 = vrot.slane %v608, %v611
        %v613 = vmul.f32 %v607, %v612
        %v614 = vadd.f32 %v602, %v613
        %vm615 = vcmp.lt.s32.totalorder %v588, 2
        %v616 = vrot.slane %v582, 6
        %v617 = vsel %vm615, 1, 0
        %vm618 = vcmp.eq.s32.totalorder %v617, 1
        %v619 = vsel %vm618, 0.0, %v616
        %v620 = vld [vmem:[%s5 + $0x1] sm:$0x1]
        %v621 = vlaneseq
        %v622 = vshrl.u32 %v621, 7
        %v623 = vsub.s32 0, %v622
        %v624 = vrot.slane %v620, %v623
        %v625 = vmul.f32 %v619, %v624
        %v626 = vadd.f32 %v614, %v625
        %vm627 = vcmp.lt.s32.totalorder %v588, 1
        %v628 = vrot.slane %v582, 7
        %v629 = vsel %vm627, 1, 0
        %vm630 = vcmp.eq.s32.totalorder %v629, 1
        %v631 = vsel %vm630, 0.0, %v628
        %v632 = vld [vmem:[%s5 + $0x2] sm:$0x1]
        %v633 = vlaneseq
        %v634 = vshrl.u32 %v633, 7
        %v635 = vsub.s32 0, %v634
        %v636 = vrot.slane %v632, %v635
        %v637 = vmul.f32 %v631, %v636
        %v638 = vadd.f32 %v626, %v637
        %v639 = vsub.f32 0.0, %v638
        %v640 = vmul.f32 %v639, 1.442695
        %v641 = vpow.pop %v640
        %v642 = vadd.f32 %v641, 1.0
        %v643 = vrcp.pop %v642
        %v644 = vmul.f32 1.0, %v643
        %v645 = vmul.f32 %v638, %v644
        %v646 = vpack.c.bf16 %v645, %v645
        %v647 = vld [vmem:[%s7] sm:$0xf]
        %v648 = vld [vmem:[%s7 + $0x4] sm:$0xf]
        %v649 = vld [vmem:[%s7 + $0x8] sm:$0xf]
        %v650 = vld [vmem:[%s7 + $0xc] sm:$0xf]
        %v651 = vld [vmem:[%s7 + $0x10] sm:$0xf]
        %v652 = vld [vmem:[%s7 + $0x14] sm:$0xf]
        %v653 = vld [vmem:[%s7 + $0x18] sm:$0xf]
        %v654 = vld [vmem:[%s7 + $0x1c] sm:$0xf]
        %v663 = vunpack.c.l.b16 %v647
        %v664 = vunpack.c.l.b16 %v648
        %v665 = vunpack.c.l.b16 %v649
        %v666 = vunpack.c.l.b16 %v650
        %v667 = vunpack.c.l.b16 %v651
        %v668 = vunpack.c.l.b16 %v652
        %v669 = vunpack.c.l.b16 %v653
        %v670 = vunpack.c.l.b16 %v654
        %v671 = vpack.c.b16 %v664, %v663
        %v672 = vpack.c.b16 %v666, %v665
        %v673 = vpack.c.b16 %v668, %v667
        %v674 = vpack.c.b16 %v670, %v669
        %vm679 = vcmask 523264
        %v681 = vsel %vm679, %v646, 0
        %683 = vmatprep.subr.bf16.mxu0 0
        %684 = vmatpush1.bf16.msra.mxu0 %v671
        %685 = vmatprep.subr.bf16.mxu0 0
        %686 = vmatpush1.bf16.msra.mxu0 %v672
        %687 = vmatprep.subr.bf16.mxu0 0
        %688 = vmatpush1.bf16.msra.mxu0 %v673
        %689 = vmatprep.subr.bf16.mxu0 0
        %690 = vmatpush1.bf16.msra.mxu0 %v674
        %691 = vmatprep.subr.bf16.mxu0 0
        %692 = vmatpush1.bf16.msra.mxu0 0
        %693 = vmatprep.subr.bf16.mxu0 0
        %694 = vmatpush1.bf16.msra.mxu0 0
        %695 = vmatprep.subr.bf16.mxu0 0
        %696 = vmatpush1.bf16.msra.mxu0 0
        %697 = vmatprep.subr.bf16.mxu0 0
        %698 = vmatpush1.bf16.msra.mxu0 0
        %699 = vmatprep.subr.bf16.mxu0 0
        %700 = vmatpush1.bf16.msra.mxu0 0
        %701 = vmatprep.subr.bf16.mxu0 0
        %702 = vmatpush1.bf16.msra.mxu0 0
        %703 = vmatprep.subr.bf16.mxu0 0
        %704 = vmatpush1.bf16.msra.mxu0 0
        %705 = vmatprep.subr.bf16.mxu0 0
        %706 = vmatpush1.bf16.msra.mxu0 0
        %707 = vmatprep.subr.bf16.mxu0 0
        %708 = vmatpush1.bf16.msra.mxu0 0
        %709 = vmatprep.subr.bf16.mxu0 0
        %710 = vmatpush1.bf16.msra.mxu0 0
        %711 = vmatprep.subr.bf16.mxu0 0
        %712 = vmatpush1.bf16.msra.mxu0 0
        %713 = vmatprep.subr.bf16.mxu0 0
        %714 = vmatpush1.bf16.msra.mxu0 0
        %715 = vmatprep.mubr.bf16.mxu0 0
        %716 = vmatmul.mubr.bf16.gmra.mrb[0].mxu0 %v681
        %v717 = vpop.f32.mrb[0].mxu0
        %v718 = vadd.f32 0.0, %v717
        %v719 = vpop.f32.mrb[0].mxu0
        %v720 = vpop.f32.mrb[0].mxu0
        %v721 = vpop.f32.mrb[0].mxu0
        %722 = vdwg.mxu0
        %v723 = vpack.c.bf16 %v718, %v718
        %v724 = vld [vmem:[%s8] sm:$0x1]
        %v725 = vld [vmem:[%s9] sm:$0x1]
        %v727 = vlaneseq
        %v728 = vshrl.u32 %v727, 7
        %v729 = vsub.s32 0, %v728
        %v730 = vrot.slane %v725, %v729
        %vm732 = vcmask 15360
        %v734 = vsel %vm732, %v723, 0
        %vm736 = vcmask 1040384
        %v738 = vsel %vm736, %v724, 0
        %740 = vmatprep.subr.bf16.mxu0 0
        %741 = vmatpush1.bf16.msra.mxu0 %v738
        %742 = vmatprep.subr.bf16.mxu0 0
        %743 = vmatpush1.bf16.msra.mxu0 0
        %744 = vmatprep.subr.bf16.mxu0 0
        %745 = vmatpush1.bf16.msra.mxu0 0
        %746 = vmatprep.subr.bf16.mxu0 0
        %747 = vmatpush1.bf16.msra.mxu0 0
        %748 = vmatprep.subr.bf16.mxu0 0
        %749 = vmatpush1.bf16.msra.mxu0 0
        %750 = vmatprep.subr.bf16.mxu0 0
        %751 = vmatpush1.bf16.msra.mxu0 0
        %752 = vmatprep.subr.bf16.mxu0 0
        %753 = vmatpush1.bf16.msra.mxu0 0
        %754 = vmatprep.subr.bf16.mxu0 0
        %755 = vmatpush1.bf16.msra.mxu0 0
        %756 = vmatprep.subr.bf16.mxu0 0
        %757 = vmatpush1.bf16.msra.mxu0 0
        %758 = vmatprep.subr.bf16.mxu0 0
        %759 = vmatpush1.bf16.msra.mxu0 0
        %760 = vmatprep.subr.bf16.mxu0 0
        %761 = vmatpush1.bf16.msra.mxu0 0
        %762 = vmatprep.subr.bf16.mxu0 0
        %763 = vmatpush1.bf16.msra.mxu0 0
        %764 = vmatprep.subr.bf16.mxu0 0
        %765 = vmatpush1.bf16.msra.mxu0 0
        %766 = vmatprep.subr.bf16.mxu0 0
        %767 = vmatpush1.bf16.msra.mxu0 0
        %768 = vmatprep.subr.bf16.mxu0 0
        %769 = vmatpush1.bf16.msra.mxu0 0
        %770 = vmatprep.subr.bf16.mxu0 0
        %771 = vmatpush1.bf16.msra.mxu0 0
        %772 = vmatprep.mubr.bf16.mxu0 0
        %773 = vmatmul.mubr.bf16.gmra.mrb[0].mxu0 %v734
        %v774 = vpop.f32.mrb[0].mxu0
        %v775 = vadd.f32 %v730, %v774
        %v776 = vpop.f32.mrb[0].mxu0
        %v777 = vpop.f32.mrb[0].mxu0
        %v778 = vpop.f32.mrb[0].mxu0
        %779 = vdwg.mxu0
        %v780 = vmax.f32 %v775, 0.0
        %v781 = vand.u32 2147483647, %v775
        %v782 = vsub.f32 0.0, %v781
        %v783 = vmul.f32 %v782, 1.442695
        %v784 = vpow.pop %v783
        %v785 = vadd.f32 %v784, 1.0
        %v786 = vlog2.pop %v785
        %v787 = vmul.f32 %v786, 0.6931472
        %v788 = vadd.f32 %v780, %v787
        %v789 = vld [vmem:[%s10] sm:$0xff]
        %v790 = vld [vmem:[%s10 + $0x8] sm:$0xff]
        %v792 = vcombine.high %v788, %v788
        %v794 = vunpack.c.l.s4 1966171168
        %v795 = vunpack.c.0.s8 %v794
        %v796 = vlaneseq
        %v797 = vshrl.u32 %v796, 7
        %v798 = vsub.s32 %v795, %v797
        %v799 = vrot.slane %v788, %v798
        %v801 = vunpack.c.l.s4 1966171168
        %v802 = vunpack.c.0.s8 %v801
        %v803 = vlaneseq
        %v804 = vshrl.u32 %v803, 7
        %v805 = vsub.s32 %v802, %v804
        %v806 = vrot.slane %v792, %v805
        %v807 = vcombine.high %v799, %v799
        %v808 = vcombine.high %v806, %v806
        %v810 = vunpack.c.l.s4 1966171168
        %v811 = vunpack.c.0.s8 %v810
        %v812 = vlaneseq
        %v813 = vshrl.u32 %v812, 7
        %v814 = vsub.s32 %v811, %v813
        %v815 = vrot.slane %v799, %v814
        %v817 = vunpack.c.l.s4 1966171168
        %v818 = vunpack.c.0.s8 %v817
        %v819 = vlaneseq
        %v820 = vshrl.u32 %v819, 7
        %v821 = vsub.s32 %v818, %v820
        %v822 = vrot.slane %v806, %v821
        %v824 = vunpack.c.l.s4 1966171168
        %v825 = vunpack.c.0.s8 %v824
        %v826 = vlaneseq
        %v827 = vshrl.u32 %v826, 7
        %v828 = vsub.s32 %v825, %v827
        %v829 = vrot.slane %v807, %v828
        %v831 = vunpack.c.l.s4 1966171168
        %v832 = vunpack.c.0.s8 %v831
        %v833 = vlaneseq
        %v834 = vshrl.u32 %v833, 7
        %v835 = vsub.s32 %v832, %v834
        %v836 = vrot.slane %v808, %v835
        %v837 = vcombine.high %v815, %v815
        %v838 = vcombine.high %v822, %v822
        %v839 = vcombine.high %v829, %v829
        %v840 = vcombine.high %v836, %v836
        %v841 = vlaneseq
        %v842 = vshrl.u32 %v841, 7
        %v843 = vsub.s32 0, %v842
        %v844 = vrot.slane %v815, %v843
        %v845 = vlaneseq
        %v846 = vshrl.u32 %v845, 7
        %v847 = vsub.s32 0, %v846
        %v848 = vrot.slane %v829, %v847
        %v849 = vlaneseq
        %v850 = vshrl.u32 %v849, 7
        %v851 = vsub.s32 0, %v850
        %v852 = vrot.slane %v837, %v851
        %v853 = vlaneseq
        %v854 = vshrl.u32 %v853, 7
        %v855 = vsub.s32 0, %v854
        %v856 = vrot.slane %v839, %v855
        %v857 = vlaneseq
        %v858 = vshrl.u32 %v857, 7
        %v859 = vsub.s32 0, %v858
        %v860 = vrot.slane %v822, %v859
        %v861 = vlaneseq
        %v862 = vshrl.u32 %v861, 7
        %v863 = vsub.s32 0, %v862
        %v864 = vrot.slane %v836, %v863
        %v865 = vlaneseq
        %v866 = vshrl.u32 %v865, 7
        %v867 = vsub.s32 0, %v866
        %v868 = vrot.slane %v838, %v867
        %v869 = vlaneseq
        %v870 = vshrl.u32 %v869, 7
        %v871 = vsub.s32 0, %v870
        %v872 = vrot.slane %v840, %v871
        %v881 = vmul.f32 %v844, %v789
        %v882 = vmul.f32 %v844, %v790
        %v883 = vmul.f32 %v848, %v789
        %v884 = vmul.f32 %v848, %v790
        %v885 = vmul.f32 %v852, %v789
        %v886 = vmul.f32 %v852, %v790
        %v887 = vmul.f32 %v856, %v789
        %v888 = vmul.f32 %v856, %v790
        %v889 = vmul.f32 %v860, %v789
        %v890 = vmul.f32 %v860, %v790
        %v891 = vmul.f32 %v864, %v789
        %v892 = vmul.f32 %v864, %v790
        %v893 = vmul.f32 %v868, %v789
        %v894 = vmul.f32 %v868, %v790
        %v895 = vmul.f32 %v872, %v789
        %v896 = vmul.f32 %v872, %v790
        %v897 = vmul.f32 %v881, 1.442695
        %v898 = vpow.pop %v897
        %v899 = vmul.f32 %v882, 1.442695
        %v900 = vpow.pop %v899
        %v901 = vmul.f32 %v883, 1.442695
        %v902 = vpow.pop %v901
        %v903 = vmul.f32 %v884, 1.442695
        %v904 = vpow.pop %v903
        %v905 = vmul.f32 %v885, 1.442695
        %v906 = vpow.pop %v905
        %v907 = vmul.f32 %v886, 1.442695
        %v908 = vpow.pop %v907
        %v909 = vmul.f32 %v887, 1.442695
        %v910 = vpow.pop %v909
        %v911 = vmul.f32 %v888, 1.442695
        %v912 = vpow.pop %v911
        %v913 = vmul.f32 %v889, 1.442695
        %v914 = vpow.pop %v913
        %v915 = vmul.f32 %v890, 1.442695
        %v916 = vpow.pop %v915
        %v917 = vmul.f32 %v891, 1.442695
        %v918 = vpow.pop %v917
        %v919 = vmul.f32 %v892, 1.442695
        %v920 = vpow.pop %v919
        %v921 = vmul.f32 %v893, 1.442695
        %v922 = vpow.pop %v921
        %v923 = vmul.f32 %v894, 1.442695
        %v924 = vpow.pop %v923
        %v925 = vmul.f32 %v895, 1.442695
        %v926 = vpow.pop %v925
        %v927 = vmul.f32 %v896, 1.442695
        %v928 = vpow.pop %v927
        %929 = vst.msk [vmem:[#allocation2] sm:$0xff] %vm679, %v898
        %930 = vst.msk [vmem:[#allocation2 + $0x8] sm:$0xff] %vm679, %v900
        %931 = vst.msk [vmem:[#allocation2 + $0x10] sm:$0xff] %vm679, %v902
        %932 = vst.msk [vmem:[#allocation2 + $0x18] sm:$0xff] %vm679, %v904
        %933 = vst.msk [vmem:[#allocation2 + $0x20] sm:$0xff] %vm679, %v906
        %934 = vst.msk [vmem:[#allocation2 + $0x28] sm:$0xff] %vm679, %v908
        %935 = vst.msk [vmem:[#allocation2 + $0x30] sm:$0xff] %vm679, %v910
        %936 = vst.msk [vmem:[#allocation2 + $0x38] sm:$0xff] %vm679, %v912
        %937 = vst.msk [vmem:[#allocation2 + $0x40] sm:$0xff] %vm679, %v914
        %938 = vst.msk [vmem:[#allocation2 + $0x48] sm:$0xff] %vm679, %v916
        %939 = vst.msk [vmem:[#allocation2 + $0x50] sm:$0xff] %vm679, %v918
        %940 = vst.msk [vmem:[#allocation2 + $0x58] sm:$0xff] %vm679, %v920
        %941 = vst.msk [vmem:[#allocation2 + $0x60] sm:$0xff] %vm679, %v922
        %942 = vst.msk [vmem:[#allocation2 + $0x68] sm:$0xff] %vm679, %v924
        %943 = vst.msk [vmem:[#allocation2 + $0x70] sm:$0xff] %vm679, %v926
        %944 = vst.msk [vmem:[#allocation2 + $0x78] sm:$0xff] %vm679, %v928
        %v945 = vmul.f32 %v788, %v645
        %v947 = vcombine.high %v945, %v945
        %v949 = vunpack.c.l.s4 1966171168
        %v950 = vunpack.c.0.s8 %v949
        %v951 = vlaneseq
        %v952 = vshrl.u32 %v951, 7
        %v953 = vsub.s32 %v950, %v952
        %v954 = vrot.slane %v945, %v953
        %v956 = vunpack.c.l.s4 1966171168
        %v957 = vunpack.c.0.s8 %v956
        %v958 = vlaneseq
        %v959 = vshrl.u32 %v958, 7
        %v960 = vsub.s32 %v957, %v959
        %v961 = vrot.slane %v947, %v960
        %v962 = vcombine.high %v954, %v954
        %v963 = vcombine.high %v961, %v961
        %v965 = vunpack.c.l.s4 1966171168
        %v966 = vunpack.c.0.s8 %v965
        %v967 = vlaneseq
        %v968 = vshrl.u32 %v967, 7
        %v969 = vsub.s32 %v966, %v968
        %v970 = vrot.slane %v954, %v969
        %v972 = vunpack.c.l.s4 1966171168
        %v973 = vunpack.c.0.s8 %v972
        %v974 = vlaneseq
        %v975 = vshrl.u32 %v974, 7
        %v976 = vsub.s32 %v973, %v975
        %v977 = vrot.slane %v961, %v976
        %v979 = vunpack.c.l.s4 1966171168
        %v980 = vunpack.c.0.s8 %v979
        %v981 = vlaneseq
        %v982 = vshrl.u32 %v981, 7
        %v983 = vsub.s32 %v980, %v982
        %v984 = vrot.slane %v962, %v983
        %v986 = vunpack.c.l.s4 1966171168
        %v987 = vunpack.c.0.s8 %v986
        %v988 = vlaneseq
        %v989 = vshrl.u32 %v988, 7
        %v990 = vsub.s32 %v987, %v989
        %v991 = vrot.slane %v963, %v990
        %v992 = vcombine.high %v970, %v970
        %v993 = vcombine.high %v977, %v977
        %v994 = vcombine.high %v984, %v984
        %v995 = vcombine.high %v991, %v991
        %v996 = vlaneseq
        %v997 = vshrl.u32 %v996, 7
        %v998 = vsub.s32 0, %v997
        %v999 = vrot.slane %v718, %v998
        %s1001 = sor.u32 256, 2
        %1002 = vbcast.lane.b32.xlu0 %v999, %s1001
        %v1003 = vpop.permute.xlu0 %1002
        %s1005 = sor.u32 256, 10
        %1006 = vbcast.lane.b32.xlu0 %v999, %s1005
        %v1007 = vpop.permute.xlu0 %1006
        %v1008 = vlaneseq
        %v1009 = vshrl.u32 %v1008, 7
        %v1010 = vsub.s32 1, %v1009
        %v1011 = vrot.slane %v718, %v1010
        %s1013 = sor.u32 256, 2
        %1014 = vbcast.lane.b32.xlu0 %v1011, %s1013
        %v1015 = vpop.permute.xlu0 %1014
        %s1017 = sor.u32 256, 10
        %1018 = vbcast.lane.b32.xlu0 %v1011, %s1017
        %v1019 = vpop.permute.xlu0 %1018
        %v1020 = vlaneseq
        %v1021 = vshrl.u32 %v1020, 7
        %v1022 = vsub.s32 2, %v1021
        %v1023 = vrot.slane %v718, %v1022
        %s1025 = sor.u32 256, 2
        %1026 = vbcast.lane.b32.xlu0 %v1023, %s1025
        %v1027 = vpop.permute.xlu0 %1026
        %s1029 = sor.u32 256, 10
        %1030 = vbcast.lane.b32.xlu0 %v1023, %s1029
        %v1031 = vpop.permute.xlu0 %1030
        %v1032 = vlaneseq
        %v1033 = vshrl.u32 %v1032, 7
        %v1034 = vsub.s32 3, %v1033
        %v1035 = vrot.slane %v718, %v1034
        %s1037 = sor.u32 256, 2
        %1038 = vbcast.lane.b32.xlu0 %v1035, %s1037
        %v1039 = vpop.permute.xlu0 %1038
        %s1041 = sor.u32 256, 10
        %1042 = vbcast.lane.b32.xlu0 %v1035, %s1041
        %v1043 = vpop.permute.xlu0 %1042
        %v1044 = vlaneseq
        %v1045 = vshrl.u32 %v1044, 7
        %v1046 = vsub.s32 4, %v1045
        %v1047 = vrot.slane %v718, %v1046
        %s1049 = sor.u32 256, 2
        %1050 = vbcast.lane.b32.xlu0 %v1047, %s1049
        %v1051 = vpop.permute.xlu0 %1050
        %s1053 = sor.u32 256, 10
        %1054 = vbcast.lane.b32.xlu0 %v1047, %s1053
        %v1055 = vpop.permute.xlu0 %1054
        %v1056 = vlaneseq
        %v1057 = vshrl.u32 %v1056, 7
        %v1058 = vsub.s32 5, %v1057
        %v1059 = vrot.slane %v718, %v1058
        %s1061 = sor.u32 256, 2
        %1062 = vbcast.lane.b32.xlu0 %v1059, %s1061
        %v1063 = vpop.permute.xlu0 %1062
        %s1065 = sor.u32 256, 10
        %1066 = vbcast.lane.b32.xlu0 %v1059, %s1065
        %v1067 = vpop.permute.xlu0 %1066
        %v1068 = vlaneseq
        %v1069 = vshrl.u32 %v1068, 7
        %v1070 = vsub.s32 6, %v1069
        %v1071 = vrot.slane %v718, %v1070
        %s1073 = sor.u32 256, 2
        %1074 = vbcast.lane.b32.xlu0 %v1071, %s1073
        %v1075 = vpop.permute.xlu0 %1074
        %s1077 = sor.u32 256, 10
        %1078 = vbcast.lane.b32.xlu0 %v1071, %s1077
        %v1079 = vpop.permute.xlu0 %1078
        %v1080 = vlaneseq
        %v1081 = vshrl.u32 %v1080, 7
        %v1082 = vsub.s32 7, %v1081
        %v1083 = vrot.slane %v718, %v1082
        %s1085 = sor.u32 256, 2
        %1086 = vbcast.lane.b32.xlu0 %v1083, %s1085
        %v1087 = vpop.permute.xlu0 %1086
        %s1089 = sor.u32 256, 10
        %1090 = vbcast.lane.b32.xlu0 %v1083, %s1089
        %v1091 = vpop.permute.xlu0 %1090
        %v1092 = vlaneseq
        %v1093 = vshrl.u32 %v1092, 7
        %v1094 = vsub.s32 0, %v1093
        %v1095 = vrot.slane %v970, %v1094
        %v1096 = vlaneseq
        %v1097 = vshrl.u32 %v1096, 7
        %v1098 = vsub.s32 0, %v1097
        %v1099 = vrot.slane %v984, %v1098
        %v1100 = vlaneseq
        %v1101 = vshrl.u32 %v1100, 7
        %v1102 = vsub.s32 0, %v1101
        %v1103 = vrot.slane %v992, %v1102
        %v1104 = vlaneseq
        %v1105 = vshrl.u32 %v1104, 7
        %v1106 = vsub.s32 0, %v1105
        %v1107 = vrot.slane %v994, %v1106
        %v1108 = vlaneseq
        %v1109 = vshrl.u32 %v1108, 7
        %v1110 = vsub.s32 0, %v1109
        %v1111 = vrot.slane %v977, %v1110
        %v1112 = vlaneseq
        %v1113 = vshrl.u32 %v1112, 7
        %v1114 = vsub.s32 0, %v1113
        %v1115 = vrot.slane %v991, %v1114
        %v1116 = vlaneseq
        %v1117 = vshrl.u32 %v1116, 7
        %v1118 = vsub.s32 0, %v1117
        %v1119 = vrot.slane %v993, %v1118
        %v1120 = vlaneseq
        %v1121 = vshrl.u32 %v1120, 7
        %v1122 = vsub.s32 0, %v1121
        %v1123 = vrot.slane %v995, %v1122
        %v1132 = vmul.f32 %v1095, %v1003
        %v1133 = vmul.f32 %v1095, %v1007
        %v1134 = vmul.f32 %v1099, %v1015
        %v1135 = vmul.f32 %v1099, %v1019
        %v1136 = vmul.f32 %v1103, %v1027
        %v1137 = vmul.f32 %v1103, %v1031
        %v1138 = vmul.f32 %v1107, %v1039
        %v1139 = vmul.f32 %v1107, %v1043
        %v1140 = vmul.f32 %v1111, %v1051
        %v1141 = vmul.f32 %v1111, %v1055
        %v1142 = vmul.f32 %v1115, %v1063
        %v1143 = vmul.f32 %v1115, %v1067
        %v1144 = vmul.f32 %v1119, %v1075
        %v1145 = vmul.f32 %v1119, %v1079
        %v1146 = vmul.f32 %v1123, %v1087
        %v1147 = vmul.f32 %v1123, %v1091
        %1148 = vst.msk [vmem:[#allocation3] sm:$0xff] %vm679, %v1132
        %1149 = vst.msk [vmem:[#allocation3 + $0x8] sm:$0xff] %vm679, %v1133
        %1150 = vst.msk [vmem:[#allocation3 + $0x10] sm:$0xff] %vm679, %v1134
        %1151 = vst.msk [vmem:[#allocation3 + $0x18] sm:$0xff] %vm679, %v1135
        %1152 = vst.msk [vmem:[#allocation3 + $0x20] sm:$0xff] %vm679, %v1136
        %1153 = vst.msk [vmem:[#allocation3 + $0x28] sm:$0xff] %vm679, %v1137
        %1154 = vst.msk [vmem:[#allocation3 + $0x30] sm:$0xff] %vm679, %v1138
        %1155 = vst.msk [vmem:[#allocation3 + $0x38] sm:$0xff] %vm679, %v1139
        %1156 = vst.msk [vmem:[#allocation3 + $0x40] sm:$0xff] %vm679, %v1140
        %1157 = vst.msk [vmem:[#allocation3 + $0x48] sm:$0xff] %vm679, %v1141
        %1158 = vst.msk [vmem:[#allocation3 + $0x50] sm:$0xff] %vm679, %v1142
        %1159 = vst.msk [vmem:[#allocation3 + $0x58] sm:$0xff] %vm679, %v1143
        %1160 = vst.msk [vmem:[#allocation3 + $0x60] sm:$0xff] %vm679, %v1144
        %1161 = vst.msk [vmem:[#allocation3 + $0x68] sm:$0xff] %vm679, %v1145
        %1162 = vst.msk [vmem:[#allocation3 + $0x70] sm:$0xff] %vm679, %v1146
        %1163 = vst.msk [vmem:[#allocation3 + $0x78] sm:$0xff] %vm679, %v1147
        %1165 = vrot.lane.b32.xlu0 %v718, 110
        %v1166 = vpop.permute.xlu0 %1165
        %vm1168 = vcmask 130048
        %1169 = vst.msk [vmem:[#allocation4] sm:$0xff] %vm1168, %v1166
        loop: start=0, step=1, limit=8
        $region73: #{tpu_custom_call.1} parent=71 // loop_pre_header
          _
        $region74: #{tpu_custom_call.1} parent=71 // loop_header
          %s1171 = sphi 0, %s1175
          %p1172 = scmp.ge.s32.totalorder %s1171, 8
          %v1176 = vphi 0.0, %v1187
          %v1177 = vphi 0.0, %v1188
        $region75: #{tpu_custom_call.1} parent=71 // loop_header_branch
          %1174 = sbr.rel (%p1172) target = $region79
        $region76: #{tpu_custom_call.1} parent=71 // loop_body
          %s1178 = smul.u32 %s1171, 16
          %s1179 = scalar_lea.vmem [#allocation2], %s1178
          %v1180 = vld [vmem:[%s1179] sm:$0xff]
          %v1181 = vld [vmem:[%s1179 + $0x8] sm:$0xff]
          %v1182 = vmul.f32 %v1176, %v1180
          %v1183 = vmul.f32 %v1177, %v1181
          %s1184 = scalar_lea.vmem [#allocation3], %s1178
          %v1185 = vld [vmem:[%s1184] sm:$0xff]
          %v1186 = vld [vmem:[%s1184 + $0x8] sm:$0xff]
          %v1187 = vadd.f32 %v1182, %v1185
          %v1188 = vadd.f32 %v1183, %v1186
          %s1189 = scalar_lea.vmem [#allocation4], %s1171
          %v1190 = vld [vmem:[%s1189] sm:$0x1]
          %v1192 = vsel %vm1168, %v1190, 0
          %1194 = vmatprep.subr.mxu0 0.0
          %1195 = vmatpush1.msra.mxu0 %v1187
          %1196 = vmatprep.subr.mxu0 0.0
          %1197 = vmatpush1.msra.mxu0 %v1188
          %1198 = vmatprep.subr.mxu0 0.0
          %1199 = vmatpush1.msra.mxu0 0.0
          %1200 = vmatprep.subr.mxu0 0.0
          %1201 = vmatpush1.msra.mxu0 0.0
          %1202 = vmatprep.subr.mxu0 0.0
          %1203 = vmatpush1.msra.mxu0 0.0
          %1204 = vmatprep.subr.mxu0 0.0
          %1205 = vmatpush1.msra.mxu0 0.0
          %1206 = vmatprep.subr.mxu0 0.0
          %1207 = vmatpush1.msra.mxu0 0.0
          %1208 = vmatprep.subr.mxu0 0.0
          %1209 = vmatpush1.msra.mxu0 0.0
          %1210 = vmatprep.subr.mxu0 0.0
          %1211 = vmatpush1.msra.mxu0 0.0
          %1212 = vmatprep.subr.mxu0 0.0
          %1213 = vmatpush1.msra.mxu0 0.0
          %1214 = vmatprep.subr.mxu0 0.0
          %1215 = vmatpush1.msra.mxu0 0.0
          %1216 = vmatprep.subr.mxu0 0.0
          %1217 = vmatpush1.msra.mxu0 0.0
          %1218 = vmatprep.subr.mxu0 0.0
          %1219 = vmatpush1.msra.mxu0 0.0
          %1220 = vmatprep.subr.mxu0 0.0
          %1221 = vmatpush1.msra.mxu0 0.0
          %1222 = vmatprep.subr.mxu0 0.0
          %1223 = vmatpush1.msra.mxu0 0.0
          %1224 = vmatprep.subr.mxu0 0.0
          %1225 = vmatpush1.msra.mxu0 0.0
          %1226 = vmatprep.subr.mxu0 0.0
          %1227 = vmatpush1.msra.mxu0 0.0
          %1228 = vmatprep.subr.mxu0 0.0
          %1229 = vmatpush1.msra.mxu0 0.0
          %1230 = vmatprep.subr.mxu0 0.0
          %1231 = vmatpush1.msra.mxu0 0.0
          %1232 = vmatprep.subr.mxu0 0.0
          %1233 = vmatpush1.msra.mxu0 0.0
          %1234 = vmatprep.subr.mxu0 0.0
          %1235 = vmatpush1.msra.mxu0 0.0
          %1236 = vmatprep.subr.mxu0 0.0
          %1237 = vmatpush1.msra.mxu0 0.0
          %1238 = vmatprep.subr.mxu0 0.0
          %1239 = vmatpush1.msra.mxu0 0.0
          %1240 = vmatprep.subr.mxu0 0.0
          %1241 = vmatpush1.msra.mxu0 0.0
          %1242 = vmatprep.subr.mxu0 0.0
          %1243 = vmatpush1.msra.mxu0 0.0
          %1244 = vmatprep.subr.mxu0 0.0
          %1245 = vmatpush1.msra.mxu0 0.0
          %1246 = vmatprep.subr.mxu0 0.0
          %1247 = vmatpush1.msra.mxu0 0.0
          %1248 = vmatprep.subr.mxu0 0.0
          %1249 = vmatpush1.msra.mxu0 0.0
          %1250 = vmatprep.subr.mxu0 0.0
          %1251 = vmatpush1.msra.mxu0 0.0
          %1252 = vmatprep.subr.mxu0 0.0
          %1253 = vmatpush1.msra.mxu0 0.0
          %1254 = vmatprep.subr.mxu0 0.0
          %1255 = vmatpush1.msra.mxu0 0.0
          %1256 = vmatprep.subr.mxu0 0.0
          %1257 = vmatpush1.msra.mxu0 0.0
          %1258 = vmatprep.mubr.f32.mxu0 0.0
          %1259 = vmatmul.mubr.f32.gmra.mrb[0].mxu0 %v1192
          %v1260 = vpop.f32.mrb[0].mxu0
          %v1261 = vadd.f32 0.0, %v1260
          %v1262 = vpop.f32.mrb[0].mxu0
          %1263 = vdwg.mxu0
          %s1264 = scalar_lea.vmem [#allocation5], %s1171
          %vm1265 = vcmask 516096
          %1266 = vst.msk [vmem:[%s1264] sm:$0x1] %vm1265, %v1261
        $region77: #{tpu_custom_call.1} parent=71 // loop_footer
          %s1175 = sadd.s32 1, %s1171
        $region78: #{tpu_custom_call.1} parent=71 // loop_footer_branch
          %1170 = sbr.rel target = $region74
        $region79: #{tpu_custom_call.1} parent=71 // loop_exit
          _
        %v1267 = vld [vmem:[#allocation5] sm:$0xff]
        %v1268 = vld [vmem:[%s11] sm:$0x1]
        %v1270 = vlaneseq
        %v1271 = vshrl.u32 %v1270, 7
        %v1272 = vsub.s32 0, %v1271
        %v1273 = vrot.slane %v1268, %v1272
        %v1275 = vmul.f32 %v1273, %v645
        %v1276 = vadd.f32 %v1267, %v1275
        %v1277 = vsub.f32 0.0, %v582
        %v1278 = vmul.f32 %v1277, 1.442695
        %v1279 = vpow.pop %v1278
        %v1280 = vadd.f32 %v1279, 1.0
        %v1281 = vrcp.pop %v1280
        %v1282 = vmul.f32 1.0, %v1281
        %v1283 = vmul.f32 %v582, %v1282
        %1285 = vrot.lane.b32.xlu0 %v1283, 64
        %v1286 = vpop.permute.xlu0 %1285
        %v1288 = vmul.f32 %v1276, %v1286
        %v1289 = vpack.c.bf16 %v1288, %v1288
        %v1290 = vld [vmem:[%s12] sm:$0xf]
        %v1291 = vld [vmem:[%s12 + $0x4] sm:$0xf]
        %v1292 = vld [vmem:[%s12 + $0x8] sm:$0xf]
        %v1293 = vld [vmem:[%s12 + $0xc] sm:$0xf]
        %v1294 = vld [vmem:[%s12 + $0x10] sm:$0xf]
        %v1295 = vld [vmem:[%s12 + $0x14] sm:$0xf]
        %v1296 = vld [vmem:[%s12 + $0x18] sm:$0xf]
        %v1297 = vld [vmem:[%s12 + $0x1c] sm:$0xf]
        %v1306 = vunpack.c.l.b16 %v1290
        %v1307 = vunpack.c.l.b16 %v1291
        %v1308 = vunpack.c.l.b16 %v1292
        %v1309 = vunpack.c.l.b16 %v1293
        %v1310 = vunpack.c.l.b16 %v1294
        %v1311 = vunpack.c.l.b16 %v1295
        %v1312 = vunpack.c.l.b16 %v1296
        %v1313 = vunpack.c.l.b16 %v1297
        %v1314 = vpack.c.b16 %v1307, %v1306
        %v1315 = vpack.c.b16 %v1309, %v1308
        %v1316 = vpack.c.b16 %v1311, %v1310
        %v1317 = vpack.c.b16 %v1313, %v1312
        %v1323 = vsel %vm679, %v1289, 0
        %1325 = vmatprep.subr.bf16.mxu0 0
        %1326 = vmatpush1.bf16.msra.mxu0 %v1314
        %1327 = vmatprep.subr.bf16.mxu0 0
        %1328 = vmatpush1.bf16.msra.mxu0 %v1315
        %1329 = vmatprep.subr.bf16.mxu0 0
        %1330 = vmatpush1.bf16.msra.mxu0 %v1316
        %1331 = vmatprep.subr.bf16.mxu0 0
        %1332 = vmatpush1.bf16.msra.mxu0 %v1317
        %1333 = vmatprep.subr.bf16.mxu0 0
        %1334 = vmatpush1.bf16.msra.mxu0 0
        %1335 = vmatprep.subr.bf16.mxu0 0
        %1336 = vmatpush1.bf16.msra.mxu0 0
        %1337 = vmatprep.subr.bf16.mxu0 0
        %1338 = vmatpush1.bf16.msra.mxu0 0
        %1339 = vmatprep.subr.bf16.mxu0 0
        %1340 = vmatpush1.bf16.msra.mxu0 0
        %1341 = vmatprep.subr.bf16.mxu0 0
        %1342 = vmatpush1.bf16.msra.mxu0 0
        %1343 = vmatprep.subr.bf16.mxu0 0
        %1344 = vmatpush1.bf16.msra.mxu0 0
        %1345 = vmatprep.subr.bf16.mxu0 0
        %1346 = vmatpush1.bf16.msra.mxu0 0
        %1347 = vmatprep.subr.bf16.mxu0 0
        %1348 = vmatpush1.bf16.msra.mxu0 0
        %1349 = vmatprep.subr.bf16.mxu0 0
        %1350 = vmatpush1.bf16.msra.mxu0 0
        %1351 = vmatprep.subr.bf16.mxu0 0
        %1352 = vmatpush1.bf16.msra.mxu0 0
        %1353 = vmatprep.subr.bf16.mxu0 0
        %1354 = vmatpush1.bf16.msra.mxu0 0
        %1355 = vmatprep.subr.bf16.mxu0 0
        %1356 = vmatpush1.bf16.msra.mxu0 0
        %1357 = vmatprep.mubr.bf16.mxu0 0
        %1358 = vmatmul.mubr.bf16.gmra.mrb[0].mxu0 %v1323
        %v1359 = vpop.f32.mrb[0].mxu0
        %v1360 = vadd.f32 0.0, %v1359
        %v1361 = vpop.f32.mrb[0].mxu0
        %v1362 = vpop.f32.mrb[0].mxu0
        %v1363 = vpop.f32.mrb[0].mxu0
        %1364 = vdwg.mxu0
        %1365 = vst.msk [vmem:[%s475] sm:$0xff] %vm495, %v1360
        %s1366 = sand.u32 %s323, 1
        %s1367 = scalar_lea.sflag [#allocation7], %s1366
        %s1368 = sand.u32 %s323, 1
        %s1369 = smul.addr %s1368, 8
        %s1370 = scalar_lea.vmem [#allocation6], %s1369
        %s1371 = sand.u32 %s349, 1
        %s1372 = scalar_lea.sflag [#allocation9], %s1371
        %s1373 = sand.u32 %s349, 1
        %s1374 = smul.addr %s1373, 8
        %s1375 = scalar_lea.vmem [#allocation8], %s1374
        // Predicated region
        $region80: #{tpu_custom_call.1} parent=71 // pred_check
          %p1376 = pneg %p333
        $region81: #{tpu_custom_call.1} parent=71 // pred_check_branch
          %1378 = sbr.rel (%p1376) target = $region83
        $region82: #{tpu_custom_call.1} parent=71 // pred_region
          %s1380 = ssub.s32 128, 128
          %1381 = vsyncadd %s1367, %s1380
          %s1382 = smul.addr %s32, 128
          %s1383 = scalar_lea.hbm %s13, %s1382
          %s1385 = sshll.u32 %s1370, 4
          %s1386 = int_to_ptr.vmem [resolvable:$true] %s1385
          %1388 = dma.vmem_to_hbm [thread:$0]  %s1386, 128, %s1383, %s1367
        $region83: #{tpu_custom_call.1} parent=71 // pred_fallthru
          _
        // Predicated region
        $region84: #{tpu_custom_call.1} parent=71 // pred_check
          %p1389 = pneg %p359
        $region85: #{tpu_custom_call.1} parent=71 // pred_check_branch
          %1391 = sbr.rel (%p1389) target = $region87
        $region86: #{tpu_custom_call.1} parent=71 // pred_region
          %s1393 = ssub.s32 128, 128
          %1394 = vsyncadd %s1372, %s1393
          %s1395 = smul.addr %s32, 128
          %s1396 = scalar_lea.hbm %s14, %s1395
          %s1398 = sshll.u32 %s1375, 4
          %s1399 = int_to_ptr.vmem [resolvable:$true] %s1398
          %1401 = dma.vmem_to_hbm [thread:$0]  %s1399, 128, %s1396, %s1372
        $region87: #{tpu_custom_call.1} parent=71 // pred_fallthru
          _
      $region72: #{tpu_custom_call.1} parent=5 // pred_fallthru
        _
      %p1402 = scmp.le.s32.totalorder 2, %s27
      // Predicated region
      $region88: #{tpu_custom_call.1} parent=5 // pred_check
        %p1403 = pneg %p1402
      $region89: #{tpu_custom_call.1} parent=5 // pred_check_branch
        %1405 = sbr.rel (%p1403) target = $region91
      $region90: #{tpu_custom_call.1} parent=5 // pred_region
        %s1406 = ssub.s32 %s27, 2
        // Predicated region
        $region92: #{tpu_custom_call.1} parent=90 // pred_check
          %p1407 = pneg %p339
        $region93: #{tpu_custom_call.1} parent=90 // pred_check_branch
          %1409 = sbr.rel (%p1407) target = $region95
        $region94: #{tpu_custom_call.1} parent=90 // pred_region
          %s1410 = sand.u32 %s324, 1
          %s1411 = scalar_lea.sflag [#allocation7], %s1410
          %s1412 = sand.u32 %s324, 1
          %s1413 = smul.addr %s1412, 8
          %s1414 = scalar_lea.vmem [#allocation6], %s1413
          %1415 = dma.done %s1411, 128
        $region95: #{tpu_custom_call.1} parent=90 // pred_fallthru
          _
        // Predicated region
        $region96: #{tpu_custom_call.1} parent=90 // pred_check
          %p1416 = pneg %p365
        $region97: #{tpu_custom_call.1} parent=90 // pred_check_branch
          %1418 = sbr.rel (%p1416) target = $region99
        $region98: #{tpu_custom_call.1} parent=90 // pred_region
          %s1419 = sand.u32 %s350, 1
          %s1420 = scalar_lea.sflag [#allocation9], %s1419
          %s1421 = sand.u32 %s350, 1
          %s1422 = smul.addr %s1421, 8
          %s1423 = scalar_lea.vmem [#allocation8], %s1422
          %1424 = dma.done %s1420, 128
        $region99: #{tpu_custom_call.1} parent=90 // pred_fallthru
          _
      $region91: #{tpu_custom_call.1} parent=5 // pred_fallthru
        _
    $region6: #{tpu_custom_call.1} parent=1 // loop_footer
      %s31 = sadd.s32 1, %s27
    $region7: #{tpu_custom_call.1} parent=1 // loop_footer_branch
      %26 = sbr.rel target = $region3
    $region8: #{tpu_custom_call.1} parent=1 // loop_exit
      _
    %1425 = vsyncpa [#allocation7], 1
    %s1426 = scalar_lea.sflag [#allocation7], 1
    %1427 = vsyncpa %s1426, 1
    %1428 = vsyncpa [#allocation9], 1
    %s1429 = scalar_lea.sflag [#allocation9], 1
    %1430 = vsyncpa %s1429, 1

</llo_original>
